<compile_context>
chip_gen: v6e
topology: v6e:2x2x1
jax: 0.10.0
libtpu: 0.0.40
codegen_flags: <defaults>
</compile_context>

<pallas_src>
import jax
import jax.numpy as jnp
from jax import lax
from jax.experimental import pallas as pl
from jax.experimental.pallas import tpu as pltpu


# ---------------------------------------------------------------------------
# Model hyper-parameters (small, synthetic)
# ---------------------------------------------------------------------------
B = 2          # batch
C = 3          # input channels
H = W = 16     # spatial
PATCH = 4      # patch size
N = (H // PATCH) * (W // PATCH)   # tokens per image = 16
P = C * PATCH * PATCH             # flattened patch dim = 48
D = 32         # embed dim
N_HEADS = 2
HEAD_DIM = D // N_HEADS
MLP_HID = 4 * D                   # = 128
N_CLASSES = 2

# Batch elements processed per grid step.  Full collapse (BB = B, GRID = 1) is
# best on all of v5e/v6e/v7x at this size.  For real deployment batches, grow
# BB (keep one token slab) before adding grid steps so matmul M fills the MXU;
# on v7x cap BB*N at ~half the v5e/v6e budget (64 MiB VMEM) and set
# vmem_limit_bytes accordingly.
BB = B
GRID = B // BB

# ---------------------------------------------------------------------------
# Fused-weight slab layout (lane-padded to 128 columns)
# ---------------------------------------------------------------------------
SLAB_COLS = 128

# bf16 matmul-weight slab: rows stacked, columns zero-padded to 128.
W_EMB_R = 0                      # [P,   D ]  rows 0:48
W_QKV_R = W_EMB_R + P            # [D, 3*D ]  rows 48:80
W_PO_R = W_QKV_R + D             # [D,   D ]  rows 80:112
W_FC1_R = W_PO_R + D             # [D, 4*D ]  rows 112:144
W_FC2_R = W_FC1_R + D            # [4*D, D ]  rows 144:272
W_ROWS = W_FC2_R + MLP_HID       # 272

# f32 vector slab: one bias / gamma / beta per row, zero-padded to 128 lanes.
(R_B_EMB, R_G1, R_BE1, R_B_QKV, R_B_PO, R_G2, R_BE2,
 R_B_FC1, R_B_FC2, R_GF, R_BEF) = range(11)
V_ROWS = 11


# ---------------------------------------------------------------------------
# Pallas kernel: full feature path for BB batch elements per grid step.
# ---------------------------------------------------------------------------
def _layernorm(x, g, b, eps=1e-5):
    mu = jnp.mean(x, axis=-1, keepdims=True)
    var = jnp.mean((x - mu) ** 2, axis=-1, keepdims=True)
    return (x - mu) * lax.rsqrt(var + eps) * g + b


def tallswin_kernel(patches_ref, wslab_ref, vslab_ref, feat_ref):
    # patches_ref : [BB*N, P]          bf16
    # wslab_ref   : [W_ROWS, 128]      bf16 (matmul weights, lane-padded)
    # vslab_ref   : [V_ROWS, 128]      f32  (biases / LN params, lane-padded)
    # feat_ref    : [BB*N, 128]        f32  (D features, lane-padded to 128)
    p = patches_ref[...]                                           # bf16

    # ---- patch embedding (4x4 conv stride 4 as matmul) ----
    tok = jnp.dot(p, wslab_ref[W_EMB_R:W_EMB_R + P, 0:D],
                  preferred_element_type=jnp.float32)
    tok = tok + vslab_ref[R_B_EMB:R_B_EMB + 1, 0:D]                # [BB*N, D] f32

    # ---- Swin-style block: pre-LN window attention (single window) ----
    h = _layernorm(tok,
                   vslab_ref[R_G1:R_G1 + 1, 0:D],
                   vslab_ref[R_BE1:R_BE1 + 1, 0:D])
    qkv = jnp.dot(h.astype(jnp.bfloat16),
                  wslab_ref[W_QKV_R:W_QKV_R + D, 0:3 * D],
                  preferred_element_type=jnp.float32)
    qkv = qkv + vslab_ref[R_B_QKV:R_B_QKV + 1, 0:3 * D]            # [BB*N, 3D]

    scale = 1.0 / (HEAD_DIM ** 0.5)
    qkv_b = qkv.reshape(BB, N, 3 * D)          # leading split only (no movement)

    # Stack heads onto the batch axis -> [(head, batch), N, HEAD_DIM] in bf16.
    # Only major-axis concat of lane slices; single-batch-dim einsums below.
    def head_stack(col0):
        parts = [qkv_b[:, :, col0 + hh * HEAD_DIM:col0 + (hh + 1) * HEAD_DIM]
                 for hh in range(N_HEADS)]
        return jnp.concatenate(parts, axis=0).astype(jnp.bfloat16)

    q = head_stack(0)                          # [N_HEADS*BB, N, HEAD_DIM] bf16
    k = head_stack(D)
    v = head_stack(2 * D)

    # One batched score matmul + ONE softmax over the stacked [4, N, N] scores.
    s = jnp.einsum('bqd,bkd->bqk', q, k,
                   preferred_element_type=jnp.float32) * scale
    s = s - jnp.max(s, axis=-1, keepdims=True)
    e = jnp.exp(s)
    a = e * pl.reciprocal(jnp.sum(e, axis=-1, keepdims=True), approx=True)

    hv = jnp.einsum('bqk,bkd->bqd', a.astype(jnp.bfloat16), v,
                    preferred_element_type=jnp.float32)   # [N_HEADS*BB, N, HD]

    # Un-stack heads back onto the lane axis -> [BB, N, D] -> [BB*N, D].
    hv_lanes = jnp.concatenate(
        [hv[hh * BB:(hh + 1) * BB] for hh in range(N_HEADS)], axis=-1)
    hv2 = hv_lanes.reshape(BB * N, D)

    # Output projection stays in bf16 on the MXU (no f32 upcast of w_po).
    attn = jnp.dot(hv2.astype(jnp.bfloat16),
                   wslab_ref[W_PO_R:W_PO_R + D, 0:D],
                   preferred_element_type=jnp.float32)
    tok = tok + attn + vslab_ref[R_B_PO:R_B_PO + 1, 0:D]

    # ---- MLP ----
    h = _layernorm(tok,
                   vslab_ref[R_G2:R_G2 + 1, 0:D],
                   vslab_ref[R_BE2:R_BE2 + 1, 0:D])
    m = jnp.dot(h.astype(jnp.bfloat16),
                wslab_ref[W_FC1_R:W_FC1_R + D, :],
                preferred_element_type=jnp.float32)
    m = m + vslab_ref[R_B_FC1:R_B_FC1 + 1, :]                      # [BB*N, 128]
    m = jax.nn.gelu(m)                                             # f32 VPU/EUP
    m = jnp.dot(m.astype(jnp.bfloat16),
                wslab_ref[W_FC2_R:W_FC2_R + MLP_HID, 0:D],
                preferred_element_type=jnp.float32)
    m = m + vslab_ref[R_B_FC2:R_B_FC2 + 1, 0:D]
    tok = tok + m

    # ---- final norm -> features, lane-dense (128-wide) unmasked store ----
    feat = _layernorm(tok,
                      vslab_ref[R_GF:R_GF + 1, 0:D],
                      vslab_ref[R_BEF:R_BEF + 1, 0:D])
    pad = jnp.zeros((BB * N, SLAB_COLS - D), feat.dtype)
    feat_ref[...] = jnp.concatenate([feat, pad], axis=-1).astype(feat_ref.dtype)


# ---------------------------------------------------------------------------
# Wrapper
# ---------------------------------------------------------------------------
def _extract_patches(x_nchw):
    """NCHW -> [B*N, C*PATCH*PATCH] patch vectors (pure reshape glue)."""
    b, c, h, w = x_nchw.shape
    x = x_nchw.reshape(b, c, h // PATCH, PATCH, w // PATCH, PATCH)
    x = x.transpose(0, 2, 4, 1, 3, 5)                 # [B, Hp, Wp, C, ph, pw]
    return x.reshape(b * (h // PATCH) * (w // PATCH), c * PATCH * PATCH)


def _pad_lanes(a):
    r, c = a.shape
    return jnp.pad(a, ((0, 0), (0, SLAB_COLS - c)))


def pack_params(params):
    """Fuse the 18 small tensors into 2 lane-padded slabs (done once, eager)."""
    wslab = jnp.concatenate(
        [_pad_lanes(params[k]) for k in
         ("w_emb", "w_qkv", "w_po", "w_fc1", "w_fc2")],
        axis=0).astype(jnp.bfloat16)                               # [272, 128]
    vec_names = ("b_emb", "g1", "be1", "b_qkv", "b_po", "g2", "be2",
                 "b_fc1", "b_fc2", "gf", "bef")
    vslab = jnp.concatenate(
        [_pad_lanes(params[k].reshape(1, -1)) for k in vec_names],
        axis=0).astype(jnp.float32)                                # [11, 128]
    return {"wslab": wslab, "vslab": vslab,
            "w_head": params["w_head"], "b_head": params["b_head"]}


@jax.jit
def tallswin_forward(x_nchw, packed):
    patches = _extract_patches(x_nchw).astype(jnp.bfloat16)        # [B*N, P]

    feat_padded = pl.pallas_call(
        tallswin_kernel,
        out_shape=jax.ShapeDtypeStruct((B * N, SLAB_COLS), jnp.float32),
        grid_spec=pltpu.PrefetchScalarGridSpec(
            num_scalar_prefetch=0,
            grid=(GRID,),
            in_specs=[
                pl.BlockSpec((BB * N, P), lambda i: (i, 0)),
                # NOTE: if GRID ever becomes >1, add
                # pipeline_mode=pl.Buffered(1) to these two constant-index
                # slabs so they are not pointlessly double-buffered.
                pl.BlockSpec((W_ROWS, SLAB_COLS), lambda i: (0, 0)),
                pl.BlockSpec((V_ROWS, SLAB_COLS), lambda i: (0, 0)),
            ],
            out_specs=pl.BlockSpec((BB * N, SLAB_COLS), lambda i: (i, 0)),
        ),
        compiler_params=pltpu.CompilerParams(
            dimension_semantics=("parallel",),
            vmem_limit_bytes=32 * 1024 * 1024),
    )(patches, packed["wslab"], packed["vslab"])

    feat = feat_padded[:, :D].reshape(B, N, D)

    # Tiny classifier head + softmax stay in XLA (lane-sparse outputs removed
    # from the kernel per perf review).
    pooled = jnp.mean(feat, axis=1)                                # [B, D]
    logits = pooled @ packed["w_head"] + packed["b_head"]          # [B, 2]
    prob = jax.nn.softmax(logits, axis=1)[:, 1]                    # [B]
    return {"cls": logits, "prob": prob, "feat": feat}


# ---------------------------------------------------------------------------
# Pure-JAX f32 reference of the same synthetic backbone (for validation)
# ---------------------------------------------------------------------------
def reference_forward(x_nchw, params):
    p = _extract_patches(x_nchw).astype(jnp.float32)               # [B*N, P]
    tok = p @ params["w_emb"] + params["b_emb"]

    h = _layernorm(tok, params["g1"], params["be1"])
    qkv = h @ params["w_qkv"] + params["b_qkv"]
    scale = 1.0 / (HEAD_DIM ** 0.5)
    attn_rows = []
    for b in range(B):
        r0 = b * N
        heads = []
        for hh in range(N_HEADS):
            c = hh * HEAD_DIM
            qh = qkv[r0:r0 + N, c:c + HEAD_DIM]
            kh = qkv[r0:r0 + N, D + c:D + c + HEAD_DIM]
            vh = qkv[r0:r0 + N, 2 * D + c:2 * D + c + HEAD_DIM]
            a = jax.nn.softmax(qh @ kh.T * scale, axis=-1)
            heads.append(a @ vh)
        attn_rows.append(jnp.concatenate(heads, axis=-1))
    attn = jnp.concatenate(attn_rows, axis=0) @ params["w_po"] + params["b_po"]
    tok = tok + attn

    h = _layernorm(tok, params["g2"], params["be2"])
    m = jax.nn.gelu(h @ params["w_fc1"] + params["b_fc1"])
    m = m @ params["w_fc2"] + params["b_fc2"]
    tok = tok + m

    feat = _layernorm(tok, params["gf"], params["bef"]).reshape(B, N, D)
    pooled = jnp.mean(feat, axis=1)
    logits = pooled @ params["w_head"] + params["b_head"]
    prob = jax.nn.softmax(logits, axis=1)[:, 1]
    return {"cls": logits, "prob": prob, "feat": feat}


# ---------------------------------------------------------------------------
# Deterministic parameter init (synthetic; no checkpoint loading)
# ---------------------------------------------------------------------------
def init_params(key):
    ks = jax.random.split(key, 8)
    s = 0.05
    return {
        "w_emb":  s * jax.random.normal(ks[0], (P, D), jnp.float32),
        "b_emb":  jnp.zeros((1, D), jnp.float32),
        "g1":     jnp.ones((1, D), jnp.float32),
        "be1":    jnp.zeros((1, D), jnp.float32),
        "w_qkv":  s * jax.random.normal(ks[1], (D, 3 * D), jnp.float32),
        "b_qkv":  jnp.zeros((1, 3 * D), jnp.float32),
        "w_po":   s * jax.random.normal(ks[2], (D, D), jnp.float32),
        "b_po":   jnp.zeros((1, D), jnp.float32),
        "g2":     jnp.ones((1, D), jnp.float32),
        "be2":    jnp.zeros((1, D), jnp.float32),
        "w_fc1":  s * jax.random.normal(ks[3], (D, MLP_HID), jnp.float32),
        "b_fc1":  jnp.zeros((1, MLP_HID), jnp.float32),
        "w_fc2":  s * jax.random.normal(ks[4], (MLP_HID, D), jnp.float32),
        "b_fc2":  jnp.zeros((1, D), jnp.float32),
        "gf":     jnp.ones((1, D), jnp.float32),
        "bef":    jnp.zeros((1, D), jnp.float32),
        "w_head": s * jax.random.normal(ks[5], (D, N_CLASSES), jnp.float32),
        "b_head": jnp.zeros((1, N_CLASSES), jnp.float32),
    }


if __name__ == "__main__":
    key = jax.random.PRNGKey(0)
    kx, kp = jax.random.split(key)
    x = jax.random.normal(kx, (B, C, H, W), jnp.float32)   # NCHW like PyTorch
    params = init_params(kp)
    packed = pack_params(params)

    out = tallswin_forward(x, packed)
    jax.block_until_ready(out)

    assert out["cls"].shape == (B, N_CLASSES)
    assert out["prob"].shape == (B,)
    assert out["feat"].shape == (B, N, D)

    # prob must equal softmax(cls, axis=1)[:, 1]  (exact: both computed in XLA)
    ref_prob = jax.nn.softmax(out["cls"], axis=1)[:, 1]
    assert jnp.allclose(out["prob"], ref_prob, atol=1e-5)

    # Kernel (bf16 matmul operands, f32 accumulate) vs. pure-f32 JAX reference.
    ref = reference_forward(x, params)
    assert jnp.allclose(out["feat"], ref["feat"], atol=0.15), \
        float(jnp.max(jnp.abs(out["feat"] - ref["feat"])))
    assert jnp.allclose(out["prob"], ref["prob"], atol=0.05)

    print("KERNEL_OK")
</pallas_src>

<mosaic_0001>
module attributes {stable_mosaic.version = 11 : i64} {
  func.func @tallswin_kernel(%arg0: i32, %arg1: memref<32x48xbf16, #tpu.memory_space<vmem>>, %arg2: memref<272x128xbf16, #tpu.memory_space<vmem>>, %arg3: memref<11x128xf32, #tpu.memory_space<vmem>>, %arg4: memref<32x128xf32, #tpu.memory_space<vmem>>) attributes {dimension_semantics = [#tpu.dimension_semantics<parallel>], iteration_bounds = array<i64: 1>, scalar_prefetch = 0 : i64, scratch_operands = 0 : i64, tpu.core_type = #tpu.core_type<tc>, window_params = [{transform_indices = @transform_0, window_bounds = array<i64: 32, 48>}, {pipeline_mode = #tpu.pipeline_mode<synchronous>, transform_indices = @transform_1, window_bounds = array<i64: 272, 128>}, {pipeline_mode = #tpu.pipeline_mode<synchronous>, transform_indices = @transform_2, window_bounds = array<i64: 11, 128>}, {transform_indices = @transform_3, window_bounds = array<i64: 32, 128>}]} {
    %c0 = arith.constant 0 : index
    %c0_0 = arith.constant 0 : index
    %0 = vector.load %arg1[%c0, %c0_0] : memref<32x48xbf16, #tpu.memory_space<vmem>>, vector<32x48xbf16>
    %c0_1 = arith.constant 0 : index
    %c0_2 = arith.constant 0 : index
    %1 = vector.load %arg2[%c0_1, %c0_2] : memref<272x128xbf16, #tpu.memory_space<vmem>>, vector<48x32xbf16>
    %cst = arith.constant dense<0.000000e+00> : vector<32x32xf32>
    %2 = tpu.matmul %0, %1, %cst {dimension_numbers = #tpu.dot_dimension_numbers<[1], [0], [0], [1], [0, 0, 1, 1], [], []>} : vector<32x48xbf16>, vector<48x32xbf16>, vector<32x32xf32> -> vector<32x32xf32>
    %c0_3 = arith.constant 0 : index
    %c0_4 = arith.constant 0 : index
    %3 = vector.load %arg3[%c0_3, %c0_4] : memref<11x128xf32, #tpu.memory_space<vmem>>, vector<1x32xf32>
    %4 = vector.broadcast %3 : vector<1x32xf32> to vector<32x32xf32>
    %5 = arith.addf %2, %4 : vector<32x32xf32>
    %c1 = arith.constant 1 : index
    %c0_5 = arith.constant 0 : index
    %6 = vector.load %arg3[%c1, %c0_5] : memref<11x128xf32, #tpu.memory_space<vmem>>, vector<1x32xf32>
    %c2 = arith.constant 2 : index
    %c0_6 = arith.constant 0 : index
    %7 = vector.load %arg3[%c2, %c0_6] : memref<11x128xf32, #tpu.memory_space<vmem>>, vector<1x32xf32>
    %cst_7 = arith.constant dense<0.000000e+00> : vector<32xf32>
    %8 = vector.multi_reduction <add>, %5, %cst_7 [1] : vector<32x32xf32> to vector<32xf32>
    %9 = vector.shape_cast %8 : vector<32xf32> to vector<32x1xf32>
    %cst_8 = arith.constant 3.200000e+01 : f32
    %10 = vector.broadcast %cst_8 : f32 to vector<32x1xf32>
    %11 = arith.divf %9, %10 : vector<32x1xf32>
    %12 = vector.broadcast %11 : vector<32x1xf32> to vector<32x32xf32>
    %13 = arith.subf %5, %12 : vector<32x32xf32>
    %14 = arith.mulf %13, %13 : vector<32x32xf32>
    %cst_9 = arith.constant dense<0.000000e+00> : vector<32xf32>
    %15 = vector.multi_reduction <add>, %14, %cst_9 [1] : vector<32x32xf32> to vector<32xf32>
    %16 = vector.shape_cast %15 : vector<32xf32> to vector<32x1xf32>
    %cst_10 = arith.constant 3.200000e+01 : f32
    %17 = vector.broadcast %cst_10 : f32 to vector<32x1xf32>
    %18 = arith.divf %16, %17 : vector<32x1xf32>
    %19 = vector.broadcast %11 : vector<32x1xf32> to vector<32x32xf32>
    %20 = arith.subf %5, %19 : vector<32x32xf32>
    %cst_11 = arith.constant 9.99999974E-6 : f32
    %21 = vector.broadcast %cst_11 : f32 to vector<32x1xf32>
    %22 = arith.addf %18, %21 : vector<32x1xf32>
    %23 = math.rsqrt %22 : vector<32x1xf32>
    %24 = vector.broadcast %23 : vector<32x1xf32> to vector<32x32xf32>
    %25 = arith.mulf %20, %24 : vector<32x32xf32>
    %26 = vector.broadcast %6 : vector<1x32xf32> to vector<32x32xf32>
    %27 = arith.mulf %25, %26 : vector<32x32xf32>
    %28 = vector.broadcast %7 : vector<1x32xf32> to vector<32x32xf32>
    %29 = arith.addf %27, %28 : vector<32x32xf32>
    %30 = arith.truncf %29 : vector<32x32xf32> to vector<32x32xbf16>
    %c48 = arith.constant 48 : index
    %c0_12 = arith.constant 0 : index
    %31 = vector.load %arg2[%c48, %c0_12] : memref<272x128xbf16, #tpu.memory_space<vmem>>, vector<32x96xbf16>
    %cst_13 = arith.constant dense<0.000000e+00> : vector<32x96xf32>
    %32 = tpu.matmul %30, %31, %cst_13 {dimension_numbers = #tpu.dot_dimension_numbers<[1], [0], [0], [1], [0, 0, 1, 1], [], []>} : vector<32x32xbf16>, vector<32x96xbf16>, vector<32x96xf32> -> vector<32x96xf32>
    %c3 = arith.constant 3 : index
    %c0_14 = arith.constant 0 : index
    %33 = vector.load %arg3[%c3, %c0_14] : memref<11x128xf32, #tpu.memory_space<vmem>>, vector<1x96xf32>
    %34 = vector.broadcast %33 : vector<1x96xf32> to vector<32x96xf32>
    %35 = arith.addf %32, %34 : vector<32x96xf32>
    %36 = vector.shape_cast %35 : vector<32x96xf32> to vector<2x16x96xf32>
    %37 = vector.extract_strided_slice %36 {offsets = [0, 0, 0], sizes = [2, 16, 16], strides = [1, 1, 1]} : vector<2x16x96xf32> to vector<2x16x16xf32>
    %38 = vector.extract_strided_slice %36 {offsets = [0, 0, 16], sizes = [2, 16, 16], strides = [1, 1, 1]} : vector<2x16x96xf32> to vector<2x16x16xf32>
    %39 = tpu.concatenate %37, %38 in 0 : vector<2x16x16xf32>, vector<2x16x16xf32> -> vector<4x16x16xf32>
    %40 = arith.truncf %39 : vector<4x16x16xf32> to vector<4x16x16xbf16>
    %41 = vector.extract_strided_slice %36 {offsets = [0, 0, 32], sizes = [2, 16, 16], strides = [1, 1, 1]} : vector<2x16x96xf32> to vector<2x16x16xf32>
    %42 = vector.extract_strided_slice %36 {offsets = [0, 0, 48], sizes = [2, 16, 16], strides = [1, 1, 1]} : vector<2x16x96xf32> to vector<2x16x16xf32>
    %43 = tpu.concatenate %41, %42 in 0 : vector<2x16x16xf32>, vector<2x16x16xf32> -> vector<4x16x16xf32>
    %44 = arith.truncf %43 : vector<4x16x16xf32> to vector<4x16x16xbf16>
    %45 = vector.extract_strided_slice %36 {offsets = [0, 0, 64], sizes = [2, 16, 16], strides = [1, 1, 1]} : vector<2x16x96xf32> to vector<2x16x16xf32>
    %46 = vector.extract_strided_slice %36 {offsets = [0, 0, 80], sizes = [2, 16, 16], strides = [1, 1, 1]} : vector<2x16x96xf32> to vector<2x16x16xf32>
    %47 = tpu.concatenate %45, %46 in 0 : vector<2x16x16xf32>, vector<2x16x16xf32> -> vector<4x16x16xf32>
    %48 = arith.truncf %47 : vector<4x16x16xf32> to vector<4x16x16xbf16>
    "tpu.trace_start"() <{level = 10 : i32, message = "bqd,bkd->bqk"}> : () -> ()
    %cst_15 = arith.constant dense<0.000000e+00> : vector<4x16x16xf32>
    %49 = tpu.matmul %40, %44, %cst_15 {dimension_numbers = #tpu.dot_dimension_numbers<[2], [2], [1], [1], [0, 0, 0, 1, 1, 1], [0], [0]>} : vector<4x16x16xbf16>, vector<4x16x16xbf16>, vector<4x16x16xf32> -> vector<4x16x16xf32>
    "tpu.trace_stop"() : () -> ()
    %cst_16 = arith.constant 2.500000e-01 : f32
    %50 = vector.broadcast %cst_16 : f32 to vector<4x16x16xf32>
    %51 = arith.mulf %49, %50 : vector<4x16x16xf32>
    %cst_17 = arith.constant dense<0xFF800000> : vector<4x16xf32>
    %52 = vector.multi_reduction <maximumf>, %51, %cst_17 [2] : vector<4x16x16xf32> to vector<4x16xf32>
    %53 = vector.shape_cast %52 : vector<4x16xf32> to vector<4x16x1xf32>
    %54 = vector.broadcast %53 : vector<4x16x1xf32> to vector<4x16x16xf32>
    %55 = arith.subf %51, %54 : vector<4x16x16xf32>
    %56 = math.exp %55 : vector<4x16x16xf32>
    %cst_18 = arith.constant dense<0.000000e+00> : vector<4x16xf32>
    %57 = vector.multi_reduction <add>, %56, %cst_18 [2] : vector<4x16x16xf32> to vector<4x16xf32>
    %58 = vector.shape_cast %57 : vector<4x16xf32> to vector<4x16x1xf32>
    %59 = tpu.reciprocal %58 {approx = true} : vector<4x16x1xf32> -> vector<4x16x1xf32>
    %60 = vector.broadcast %59 : vector<4x16x1xf32> to vector<4x16x16xf32>
    %61 = arith.mulf %56, %60 : vector<4x16x16xf32>
    %62 = arith.truncf %61 : vector<4x16x16xf32> to vector<4x16x16xbf16>
    "tpu.trace_start"() <{level = 10 : i32, message = "bqk,bkd->bqd"}> : () -> ()
    %cst_19 = arith.constant dense<0.000000e+00> : vector<4x16x16xf32>
    %63 = tpu.matmul %62, %48, %cst_19 {dimension_numbers = #tpu.dot_dimension_numbers<[2], [1], [1], [2], [0, 0, 0, 1, 1, 2], [0], [0]>} : vector<4x16x16xbf16>, vector<4x16x16xbf16>, vector<4x16x16xf32> -> vector<4x16x16xf32>
    "tpu.trace_stop"() : () -> ()
    %64 = vector.extract_strided_slice %63 {offsets = [0, 0, 0], sizes = [2, 16, 16], strides = [1, 1, 1]} : vector<4x16x16xf32> to vector<2x16x16xf32>
    %65 = vector.extract_strided_slice %63 {offsets = [2, 0, 0], sizes = [2, 16, 16], strides = [1, 1, 1]} : vector<4x16x16xf32> to vector<2x16x16xf32>
    %66 = tpu.concatenate %64, %65 in 2 : vector<2x16x16xf32>, vector<2x16x16xf32> -> vector<2x16x32xf32>
    %67 = vector.shape_cast %66 : vector<2x16x32xf32> to vector<32x32xf32>
    %68 = arith.truncf %67 : vector<32x32xf32> to vector<32x32xbf16>
    %c80 = arith.constant 80 : index
    %c0_20 = arith.constant 0 : index
    %69 = vector.load %arg2[%c80, %c0_20] : memref<272x128xbf16, #tpu.memory_space<vmem>>, vector<32x32xbf16>
    %cst_21 = arith.constant dense<0.000000e+00> : vector<32x32xf32>
    %70 = tpu.matmul %68, %69, %cst_21 {dimension_numbers = #tpu.dot_dimension_numbers<[1], [0], [0], [1], [0, 0, 1, 1], [], []>} : vector<32x32xbf16>, vector<32x32xbf16>, vector<32x32xf32> -> vector<32x32xf32>
    %71 = arith.addf %5, %70 : vector<32x32xf32>
    %c4 = arith.constant 4 : index
    %c0_22 = arith.constant 0 : index
    %72 = vector.load %arg3[%c4, %c0_22] : memref<11x128xf32, #tpu.memory_space<vmem>>, vector<1x32xf32>
    %73 = vector.broadcast %72 : vector<1x32xf32> to vector<32x32xf32>
    %74 = arith.addf %71, %73 : vector<32x32xf32>
    %c5 = arith.constant 5 : index
    %c0_23 = arith.constant 0 : index
    %75 = vector.load %arg3[%c5, %c0_23] : memref<11x128xf32, #tpu.memory_space<vmem>>, vector<1x32xf32>
    %c6 = arith.constant 6 : index
    %c0_24 = arith.constant 0 : index
    %76 = vector.load %arg3[%c6, %c0_24] : memref<11x128xf32, #tpu.memory_space<vmem>>, vector<1x32xf32>
    %cst_25 = arith.constant dense<0.000000e+00> : vector<32xf32>
    %77 = vector.multi_reduction <add>, %74, %cst_25 [1] : vector<32x32xf32> to vector<32xf32>
    %78 = vector.shape_cast %77 : vector<32xf32> to vector<32x1xf32>
    %cst_26 = arith.constant 3.200000e+01 : f32
    %79 = vector.broadcast %cst_26 : f32 to vector<32x1xf32>
    %80 = arith.divf %78, %79 : vector<32x1xf32>
    %81 = vector.broadcast %80 : vector<32x1xf32> to vector<32x32xf32>
    %82 = arith.subf %74, %81 : vector<32x32xf32>
    %83 = arith.mulf %82, %82 : vector<32x32xf32>
    %cst_27 = arith.constant dense<0.000000e+00> : vector<32xf32>
    %84 = vector.multi_reduction <add>, %83, %cst_27 [1] : vector<32x32xf32> to vector<32xf32>
    %85 = vector.shape_cast %84 : vector<32xf32> to vector<32x1xf32>
    %cst_28 = arith.constant 3.200000e+01 : f32
    %86 = vector.broadcast %cst_28 : f32 to vector<32x1xf32>
    %87 = arith.divf %85, %86 : vector<32x1xf32>
    %88 = vector.broadcast %80 : vector<32x1xf32> to vector<32x32xf32>
    %89 = arith.subf %74, %88 : vector<32x32xf32>
    %cst_29 = arith.constant 9.99999974E-6 : f32
    %90 = vector.broadcast %cst_29 : f32 to vector<32x1xf32>
    %91 = arith.addf %87, %90 : vector<32x1xf32>
    %92 = math.rsqrt %91 : vector<32x1xf32>
    %93 = vector.broadcast %92 : vector<32x1xf32> to vector<32x32xf32>
    %94 = arith.mulf %89, %93 : vector<32x32xf32>
    %95 = vector.broadcast %75 : vector<1x32xf32> to vector<32x32xf32>
    %96 = arith.mulf %94, %95 : vector<32x32xf32>
    %97 = vector.broadcast %76 : vector<1x32xf32> to vector<32x32xf32>
    %98 = arith.addf %96, %97 : vector<32x32xf32>
    %99 = arith.truncf %98 : vector<32x32xf32> to vector<32x32xbf16>
    %c112 = arith.constant 112 : index
    %c0_30 = arith.constant 0 : index
    %100 = vector.load %arg2[%c112, %c0_30] : memref<272x128xbf16, #tpu.memory_space<vmem>>, vector<32x128xbf16>
    %cst_31 = arith.constant dense<0.000000e+00> : vector<32x128xf32>
    %101 = tpu.matmul %99, %100, %cst_31 {dimension_numbers = #tpu.dot_dimension_numbers<[1], [0], [0], [1], [0, 0, 1, 1], [], []>} : vector<32x32xbf16>, vector<32x128xbf16>, vector<32x128xf32> -> vector<32x128xf32>
    %c7 = arith.constant 7 : index
    %c0_32 = arith.constant 0 : index
    %102 = vector.load %arg3[%c7, %c0_32] : memref<11x128xf32, #tpu.memory_space<vmem>>, vector<1x128xf32>
    %103 = vector.broadcast %102 : vector<1x128xf32> to vector<32x128xf32>
    %104 = arith.addf %101, %103 : vector<32x128xf32>
    %105 = arith.mulf %104, %104 : vector<32x128xf32>
    %106 = arith.mulf %104, %105 : vector<32x128xf32>
    %cst_33 = arith.constant 4.471500e-02 : f32
    %107 = vector.broadcast %cst_33 : f32 to vector<32x128xf32>
    %108 = arith.mulf %107, %106 : vector<32x128xf32>
    %109 = arith.addf %104, %108 : vector<32x128xf32>
    %cst_34 = arith.constant 0.797884583 : f32
    %110 = vector.broadcast %cst_34 : f32 to vector<32x128xf32>
    %111 = arith.mulf %110, %109 : vector<32x128xf32>
    %112 = math.tanh %111 : vector<32x128xf32>
    %cst_35 = arith.constant 1.000000e+00 : f32
    %113 = vector.broadcast %cst_35 : f32 to vector<32x128xf32>
    %114 = arith.addf %113, %112 : vector<32x128xf32>
    %cst_36 = arith.constant 5.000000e-01 : f32
    %115 = vector.broadcast %cst_36 : f32 to vector<32x128xf32>
    %116 = arith.mulf %115, %114 : vector<32x128xf32>
    %117 = arith.mulf %104, %116 : vector<32x128xf32>
    %118 = arith.truncf %117 : vector<32x128xf32> to vector<32x128xbf16>
    %c144 = arith.constant 144 : index
    %c0_37 = arith.constant 0 : index
    %119 = vector.load %arg2[%c144, %c0_37] : memref<272x128xbf16, #tpu.memory_space<vmem>>, vector<128x32xbf16>
    %cst_38 = arith.constant dense<0.000000e+00> : vector<32x32xf32>
    %120 = tpu.matmul %118, %119, %cst_38 {dimension_numbers = #tpu.dot_dimension_numbers<[1], [0], [0], [1], [0, 0, 1, 1], [], []>} : vector<32x128xbf16>, vector<128x32xbf16>, vector<32x32xf32> -> vector<32x32xf32>
    %c8 = arith.constant 8 : index
    %c0_39 = arith.constant 0 : index
    %121 = vector.load %arg3[%c8, %c0_39] : memref<11x128xf32, #tpu.memory_space<vmem>>, vector<1x32xf32>
    %122 = vector.broadcast %121 : vector<1x32xf32> to vector<32x32xf32>
    %123 = arith.addf %120, %122 : vector<32x32xf32>
    %124 = arith.addf %74, %123 : vector<32x32xf32>
    %c9 = arith.constant 9 : index
    %c0_40 = arith.constant 0 : index
    %125 = vector.load %arg3[%c9, %c0_40] : memref<11x128xf32, #tpu.memory_space<vmem>>, vector<1x32xf32>
    %c10 = arith.constant 10 : index
    %c0_41 = arith.constant 0 : index
    %126 = vector.load %arg3[%c10, %c0_41] : memref<11x128xf32, #tpu.memory_space<vmem>>, vector<1x32xf32>
    %cst_42 = arith.constant dense<0.000000e+00> : vector<32xf32>
    %127 = vector.multi_reduction <add>, %124, %cst_42 [1] : vector<32x32xf32> to vector<32xf32>
    %128 = vector.shape_cast %127 : vector<32xf32> to vector<32x1xf32>
    %cst_43 = arith.constant 3.200000e+01 : f32
    %129 = vector.broadcast %cst_43 : f32 to vector<32x1xf32>
    %130 = arith.divf %128, %129 : vector<32x1xf32>
    %131 = vector.broadcast %130 : vector<32x1xf32> to vector<32x32xf32>
    %132 = arith.subf %124, %131 : vector<32x32xf32>
    %133 = arith.mulf %132, %132 : vector<32x32xf32>
    %cst_44 = arith.constant dense<0.000000e+00> : vector<32xf32>
    %134 = vector.multi_reduction <add>, %133, %cst_44 [1] : vector<32x32xf32> to vector<32xf32>
    %135 = vector.shape_cast %134 : vector<32xf32> to vector<32x1xf32>
    %cst_45 = arith.constant 3.200000e+01 : f32
    %136 = vector.broadcast %cst_45 : f32 to vector<32x1xf32>
    %137 = arith.divf %135, %136 : vector<32x1xf32>
    %138 = vector.broadcast %130 : vector<32x1xf32> to vector<32x32xf32>
    %139 = arith.subf %124, %138 : vector<32x32xf32>
    %cst_46 = arith.constant 9.99999974E-6 : f32
    %140 = vector.broadcast %cst_46 : f32 to vector<32x1xf32>
    %141 = arith.addf %137, %140 : vector<32x1xf32>
    %142 = math.rsqrt %141 : vector<32x1xf32>
    %143 = vector.broadcast %142 : vector<32x1xf32> to vector<32x32xf32>
    %144 = arith.mulf %139, %143 : vector<32x32xf32>
    %145 = vector.broadcast %125 : vector<1x32xf32> to vector<32x32xf32>
    %146 = arith.mulf %144, %145 : vector<32x32xf32>
    %147 = vector.broadcast %126 : vector<1x32xf32> to vector<32x32xf32>
    %148 = arith.addf %146, %147 : vector<32x32xf32>
    %cst_47 = arith.constant 0.000000e+00 : f32
    %149 = vector.broadcast %cst_47 : f32 to vector<32x96xf32>
    %150 = tpu.concatenate %148, %149 in 1 : vector<32x32xf32>, vector<32x96xf32> -> vector<32x128xf32>
    %c0_48 = arith.constant 0 : index
    %c0_49 = arith.constant 0 : index
    %151 = vector.load %arg4[%c0_48, %c0_49] : memref<32x128xf32, #tpu.memory_space<vmem>>, vector<32x128xf32>
    tpu.vector_store %arg4[%c0_48, %c0_49], %150 {strides = array<i32>} : memref<32x128xf32, #tpu.memory_space<vmem>>, vector<32x128xf32>,
    return
  }
  func.func @transform_0(%arg0: i32) -> (i32, i32) {
    %c0_i32 = arith.constant 0 : i32
    %c0_i32_0 = arith.constant 0 : i32
    return %arg0, %c0_i32 : i32, i32
  }
  func.func @transform_1(%arg0: i32) -> (i32, i32) {
    %c0_i32 = arith.constant 0 : i32
    %c0_i32_0 = arith.constant 0 : i32
    %c0_i32_1 = arith.constant 0 : i32
    return %c0_i32, %c0_i32_0 : i32, i32
  }
  func.func @transform_2(%arg0: i32) -> (i32, i32) {
    %c0_i32 = arith.constant 0 : i32
    %c0_i32_0 = arith.constant 0 : i32
    %c0_i32_1 = arith.constant 0 : i32
    return %c0_i32, %c0_i32_0 : i32, i32
  }
  func.func @transform_3(%arg0: i32) -> (i32, i32) {
    %c0_i32 = arith.constant 0 : i32
    %c0_i32_0 = arith.constant 0 : i32
    return %arg0, %c0_i32 : i32, i32
  }
}

</mosaic_0001>

<llo_original>
// kernel: tallswin_forward.1
$region0: #{tallswin_forward.1}
  #allocation0 [shape = 'u32[]', space=smem, size = 0x4, offset = 0x4, fixed_abs, tag = 'smem constant byte address 0x4 - core index']
  #allocation1 [shape = 'u32[144,128]{1,0:T(1,128)}', space=vmem, size = 0x12000, scoped, tag = 'internal scratch']
  %s0 = inlined_call_operand.vmem [shape: bf16[32,48], index: 0, kind: input, shape index: {}]
  %s1 = inlined_call_operand.vmem [shape: bf16[272,128], index: 1, kind: input, shape index: {}]
  %s2 = inlined_call_operand.vmem [shape: f32[11,128], index: 2, kind: input, shape index: {}]
  %s3 = inlined_call_operand.vmem [shape: f32[32,128], index: 3, kind: output, shape index: {}]
  %s4 = sld [smem:[#allocation0]]
  $region22: #{tallswin_forward.1} parent=0
    _
  %s6 = ssub.s32 1, %s4
  %s7 = scalar_select 0, %s6, %s4
  // Predicated region
  $region2: #{tallswin_forward.1} parent=0 // pred_check
    _
  $region3: #{tallswin_forward.1} parent=0 // pred_check_branch
    %9 = sbr.rel (0) target = $region5
  $region4: #{tallswin_forward.1} parent=0 // pred_region
    _
  $region5: #{tallswin_forward.1} parent=0 // pred_fallthru
    _
  // Predicated region
  $region6: #{tallswin_forward.1} parent=0 // pred_check
    _
  $region7: #{tallswin_forward.1} parent=0 // pred_check_branch
    %11 = sbr.rel (0) target = $region9
  $region8: #{tallswin_forward.1} parent=0 // pred_region
    _
  $region9: #{tallswin_forward.1} parent=0 // pred_fallthru
    _
  // Predicated region
  $region10: #{tallswin_forward.1} parent=0 // pred_check
    _
  $region11: #{tallswin_forward.1} parent=0 // pred_check_branch
    %13 = sbr.rel (0) target = $region13
  $region12: #{tallswin_forward.1} parent=0 // pred_region
    _
  $region13: #{tallswin_forward.1} parent=0 // pred_fallthru
    _
  %v15 = vld [vmem:[%s0] sm:$0xf]
  %v16 = vld [vmem:[%s0 + $0x4] sm:$0xf]
  %v17 = vld [vmem:[%s0 + $0x8] sm:$0xf]
  %v18 = vld [vmem:[%s0 + $0xc] sm:$0xf]
  %v19 = vld [vmem:[%s1] sm:$0xf]
  %v20 = vld [vmem:[%s1 + $0x4] sm:$0xf]
  %v21 = vld [vmem:[%s1 + $0x8] sm:$0xf]
  %v22 = vld [vmem:[%s1 + $0xc] sm:$0xf]
  %v23 = vld [vmem:[%s1 + $0x10] sm:$0xf]
  %v24 = vld [vmem:[%s1 + $0x14] sm:$0xf]
  %v25 = vld [vmem:[%s2] sm:$0x1]
  %v26 = vlaneseq
  %v27 = vshrl.u32 %v26, 7
  %v28 = vsub.s32 0, %v27
  %v29 = vrot.slane %v25, %v28
  %v34 = vunpack.c.l.b16 %v15
  %v35 = vunpack.c.l.b16 %v16
  %v36 = vunpack.c.l.b16 %v17
  %v37 = vunpack.c.l.b16 %v18
  %v38 = vpack.c.b16 %v35, %v34
  %v39 = vpack.c.b16 %v37, %v36
  %v46 = vunpack.c.l.b16 %v19
  %v47 = vunpack.c.l.b16 %v20
  %v48 = vunpack.c.l.b16 %v21
  %v49 = vunpack.c.l.b16 %v22
  %v50 = vunpack.c.l.b16 %v23
  %v51 = vunpack.c.l.b16 %v24
  %v52 = vpack.c.b16 %v47, %v46
  %v53 = vpack.c.b16 %v49, %v48
  %v54 = vpack.c.b16 %v51, %v50
  %vm58 = vcmask 392192
  %v60 = vsel %vm58, %v38, 0
  %v63 = vsel %vm58, %v39, 0
  %65 = vmatprep.subr.bf16.mxu0 0
  %66 = vmatpush1.bf16.msra.mxu0 0
  %67 = vmatprep.subr.bf16.mxu0 0
  %68 = vmatpush1.bf16.msra.mxu0 0
  %69 = vmatprep.subr.bf16.mxu0 0
  %70 = vmatpush1.bf16.msra.mxu0 0
  %71 = vmatprep.subr.bf16.mxu0 0
  %72 = vmatpush1.bf16.msra.mxu0 0
  %73 = vmatprep.subr.bf16.mxu0 0
  %74 = vmatpush1.bf16.msra.mxu0 0
  %75 = vmatprep.subr.bf16.mxu0 0
  %76 = vmatpush1.bf16.msra.mxu0 %v54
  %77 = vmatprep.subr.bf16.mxu0 0
  %78 = vmatpush1.bf16.msra.mxu0 %v53
  %79 = vmatprep.subr.bf16.mxu0 0
  %80 = vmatpush1.bf16.msra.mxu0 %v52
  %81 = vmatprep.subr.bf16.mxu0 0
  %82 = vmatpush2.bf16.msra.mxu0 0
  %83 = vmatprep.subr.bf16.mxu0 0
  %84 = vmatpush2.bf16.msra.mxu0 0
  %85 = vmatprep.subr.bf16.mxu0 0
  %86 = vmatpush2.bf16.msra.mxu0 0
  %87 = vmatprep.subr.bf16.mxu0 0
  %88 = vmatpush2.bf16.msra.mxu0 0
  %89 = vmatprep.subr.bf16.mxu0 0
  %90 = vmatpush2.bf16.msra.mxu0 0
  %91 = vmatprep.subr.bf16.mxu0 0
  %92 = vmatpush2.bf16.msra.mxu0 0
  %93 = vmatprep.subr.bf16.mxu0 0
  %94 = vmatpush2.bf16.msra.mxu0 0
  %95 = vmatprep.subr.bf16.mxu0 0
  %96 = vmatpush2.bf16.msra.mxu0 0
  %97 = vmatprep.mubr.bf16.mxu0 0
  %98 = vmatmul.mubr.bf16.gmra.mxu0 %v60
  %v99 = vpop.f32.mrf.mxu0
  %v100 = vadd.f32 %v29, %v99
  %v101 = vpop.f32.mrf.mxu0
  %v102 = vpop.f32.mrf.mxu0
  %v103 = vadd.f32 %v29, %v102
  %v104 = vpop.f32.mrf.mxu0
  %105 = vmatprep.mubr.bf16.mxu0 0
  %106 = vmatmul.mubr.bf16.gmra.mxu0 %v63
  %v107 = vpop.f32.mrf.mxu0
  %v108 = vadd.f32 %v29, %v107
  %v109 = vpop.f32.mrf.mxu0
  %v110 = vpop.f32.mrf.mxu0
  %v111 = vadd.f32 %v29, %v110
  %v112 = vpop.f32.mrf.mxu0
  %113 = vdwg.mxu0
  %v114 = vld [vmem:[%s2 + $0x1] sm:$0x1]
  %v115 = vld [vmem:[%s2 + $0x2] sm:$0x1]
  %vm116 = vcmask 261120
  %v117 = vsel %vm116, %v100, 0.0
  %118 = vadd.xlane.f32.xlu0 %v117
  %v119 = vpop.xlane.xlu0 %118
  %v120 = vsel %vm116, %v103, 0.0
  %121 = vadd.xlane.f32.xlu0 %v120
  %v122 = vpop.xlane.xlu0 %121
  %v123 = vsel %vm116, %v108, 0.0
  %124 = vadd.xlane.f32.xlu0 %v123
  %v125 = vpop.xlane.xlu0 %124
  %v126 = vsel %vm116, %v111, 0.0
  %127 = vadd.xlane.f32.xlu0 %v126
  %v128 = vpop.xlane.xlu0 %127
  %v129 = vrcp.pop 32.0
  %v130 = vmul.f32 %v119, %v129
  %v131 = vmul.f32 %v122, %v129
  %v132 = vmul.f32 %v125, %v129
  %v133 = vmul.f32 %v128, %v129
  %v134 = vsub.f32 %v100, %v130
  %v135 = vsub.f32 %v103, %v131
  %v136 = vsub.f32 %v108, %v132
  %v137 = vsub.f32 %v111, %v133
  %v138 = vmul.f32 %v134, %v134
  %v139 = vmul.f32 %v135, %v135
  %v140 = vmul.f32 %v136, %v136
  %v141 = vmul.f32 %v137, %v137
  %v142 = vsel %vm116, %v138, 0.0
  %143 = vadd.xlane.f32.xlu0 %v142
  %v144 = vpop.xlane.xlu0 %143
  %v145 = vsel %vm116, %v139, 0.0
  %146 = vadd.xlane.f32.xlu0 %v145
  %v147 = vpop.xlane.xlu0 %146
  %v148 = vsel %vm116, %v140, 0.0
  %149 = vadd.xlane.f32.xlu0 %v148
  %v150 = vpop.xlane.xlu0 %149
  %v151 = vsel %vm116, %v141, 0.0
  %152 = vadd.xlane.f32.xlu0 %v151
  %v153 = vpop.xlane.xlu0 %152
  %v154 = vmul.f32 %v144, %v129
  %v155 = vmul.f32 %v147, %v129
  %v156 = vmul.f32 %v150, %v129
  %v157 = vmul.f32 %v153, %v129
  %v158 = vadd.f32 %v154, 1e-05
  %v159 = vadd.f32 %v155, 1e-05
  %v160 = vadd.f32 %v156, 1e-05
  %v161 = vadd.f32 %v157, 1e-05
  %v162 = vrsqrt.pop %v158
  %v163 = vrsqrt.pop %v159
  %v164 = vrsqrt.pop %v160
  %v165 = vrsqrt.pop %v161
  %v166 = vmul.f32 %v134, %v162
  %v167 = vmul.f32 %v135, %v163
  %v168 = vmul.f32 %v136, %v164
  %v169 = vmul.f32 %v137, %v165
  %v170 = vlaneseq
  %v171 = vshrl.u32 %v170, 7
  %v172 = vsub.s32 0, %v171
  %v173 = vrot.slane %v114, %v172
  %v174 = vmul.f32 %v166, %v173
  %v175 = vmul.f32 %v167, %v173
  %v176 = vmul.f32 %v168, %v173
  %v177 = vmul.f32 %v169, %v173
  %v178 = vlaneseq
  %v179 = vshrl.u32 %v178, 7
  %v180 = vsub.s32 0, %v179
  %v181 = vrot.slane %v115, %v180
  %v182 = vadd.f32 %v174, %v181
  %v183 = vadd.f32 %v175, %v181
  %v184 = vadd.f32 %v176, %v181
  %v185 = vadd.f32 %v177, %v181
  %v186 = vpack.c.bf16 %v183, %v182
  %v187 = vpack.c.bf16 %v185, %v184
  %v188 = vld [vmem:[%s1 + $0x18] sm:$0xf]
  %v189 = vld [vmem:[%s1 + $0x1c] sm:$0xf]
  %v190 = vld [vmem:[%s1 + $0x20] sm:$0xf]
  %v191 = vld [vmem:[%s1 + $0x24] sm:$0xf]
  %v192 = vld [vmem:[%s2 + $0x3] sm:$0x1]
  %v193 = vlaneseq
  %v194 = vshrl.u32 %v193, 7
  %v195 = vsub.s32 0, %v194
  %v196 = vrot.slane %v192, %v195
  %v201 = vunpack.c.l.b16 %v188
  %v202 = vunpack.c.l.b16 %v189
  %v203 = vunpack.c.l.b16 %v190
  %v204 = vunpack.c.l.b16 %v191
  %v205 = vpack.c.b16 %v202, %v201
  %v206 = vpack.c.b16 %v204, %v203
  %v210 = vsel %vm116, %v186, 0
  %v213 = vsel %vm116, %v187, 0
  %215 = vmatprep.subr.bf16.mxu0 0
  %216 = vmatpush1.bf16.msra.mxu0 0
  %217 = vmatprep.subr.bf16.mxu0 0
  %218 = vmatpush1.bf16.msra.mxu0 0
  %219 = vmatprep.subr.bf16.mxu0 0
  %220 = vmatpush1.bf16.msra.mxu0 0
  %221 = vmatprep.subr.bf16.mxu0 0
  %222 = vmatpush1.bf16.msra.mxu0 0
  %223 = vmatprep.subr.bf16.mxu0 0
  %224 = vmatpush1.bf16.msra.mxu0 0
  %225 = vmatprep.subr.bf16.mxu0 0
  %226 = vmatpush1.bf16.msra.mxu0 0
  %227 = vmatprep.subr.bf16.mxu0 0
  %228 = vmatpush1.bf16.msra.mxu0 %v206
  %229 = vmatprep.subr.bf16.mxu0 0
  %230 = vmatpush1.bf16.msra.mxu0 %v205
  %231 = vmatprep.subr.bf16.mxu0 0
  %232 = vmatpush2.bf16.msra.mxu0 0
  %233 = vmatprep.subr.bf16.mxu0 0
  %234 = vmatpush2.bf16.msra.mxu0 0
  %235 = vmatprep.subr.bf16.mxu0 0
  %236 = vmatpush2.bf16.msra.mxu0 0
  %237 = vmatprep.subr.bf16.mxu0 0
  %238 = vmatpush2.bf16.msra.mxu0 0
  %239 = vmatprep.subr.bf16.mxu0 0
  %240 = vmatpush2.bf16.msra.mxu0 0
  %241 = vmatprep.subr.bf16.mxu0 0
  %242 = vmatpush2.bf16.msra.mxu0 0
  %243 = vmatprep.subr.bf16.mxu0 0
  %244 = vmatpush2.bf16.msra.mxu0 0
  %245 = vmatprep.subr.bf16.mxu0 0
  %246 = vmatpush2.bf16.msra.mxu0 0
  %247 = vmatprep.mubr.bf16.mxu0 0
  %248 = vmatmul.mubr.bf16.gmra.mxu0 %v210
  %v249 = vpop.f32.mrf.mxu0
  %v250 = vadd.f32 %v196, %v249
  %v251 = vpop.f32.mrf.mxu0
  %v252 = vpop.f32.mrf.mxu0
  %v253 = vadd.f32 %v196, %v252
  %v254 = vpop.f32.mrf.mxu0
  %255 = vmatprep.mubr.bf16.mxu0 0
  %256 = vmatmul.mubr.bf16.gmra.mxu0 %v213
  %v257 = vpop.f32.mrf.mxu0
  %v258 = vadd.f32 %v196, %v257
  %v259 = vpop.f32.mrf.mxu0
  %v260 = vpop.f32.mrf.mxu0
  %v261 = vadd.f32 %v196, %v260
  %v262 = vpop.f32.mrf.mxu0
  %263 = vdwg.mxu0
  %268 = vrot.lane.b32.xlu0 %v250, 112
  %v269 = vpop.permute.xlu0 %268
  %270 = vrot.lane.b32.xlu0 %v253, 112
  %v271 = vpop.permute.xlu0 %270
  %272 = vrot.lane.b32.xlu0 %v258, 112
  %v273 = vpop.permute.xlu0 %272
  %274 = vrot.lane.b32.xlu0 %v261, 112
  %v275 = vpop.permute.xlu0 %274
  %v280 = vpack.c.bf16 %v253, %v250
  %v281 = vpack.c.bf16 %v261, %v258
  %v282 = vpack.c.bf16 %v271, %v269
  %v283 = vpack.c.bf16 %v275, %v273
  %285 = vrot.lane.b32.xlu0 %v280, 96
  %v286 = vpop.permute.xlu0 %285
  %vm287 = vcmask 130048
  %v289 = vsel %vm287, %v280, 0
  %v292 = vsel %vm287, %v286, 0
  %294 = vmatprep.subr.bf16.mxu0 0
  %295 = vmatpush1.bf16.xpose.msra.mxu0 0
  %296 = vmatprep.subr.bf16.mxu0 0
  %297 = vmatpush1.bf16.xpose.msra.mxu0 0
  %298 = vmatprep.subr.bf16.mxu0 0
  %299 = vmatpush1.bf16.xpose.msra.mxu0 0
  %300 = vmatprep.subr.bf16.mxu0 0
  %301 = vmatpush1.bf16.xpose.msra.mxu0 0
  %302 = vmatprep.subr.bf16.mxu0 0
  %303 = vmatpush1.bf16.xpose.msra.mxu0 0
  %304 = vmatprep.subr.bf16.mxu0 0
  %305 = vmatpush1.bf16.xpose.msra.mxu0 0
  %306 = vmatprep.subr.bf16.mxu0 0
  %307 = vmatpush1.bf16.xpose.msra.mxu0 0
  %308 = vmatprep.subr.bf16.mxu0 0
  %309 = vmatpush1.bf16.xpose.msra.mxu0 %v292
  %310 = vmatprep.subr.bf16.mxu0 0
  %311 = vmatpush2.bf16.xpose.msra.mxu0 0
  %312 = vmatprep.subr.bf16.mxu0 0
  %313 = vmatpush2.bf16.xpose.msra.mxu0 0
  %314 = vmatprep.subr.bf16.mxu0 0
  %315 = vmatpush2.bf16.xpose.msra.mxu0 0
  %316 = vmatprep.subr.bf16.mxu0 0
  %317 = vmatpush2.bf16.xpose.msra.mxu0 0
  %318 = vmatprep.subr.bf16.mxu0 0
  %319 = vmatpush2.bf16.xpose.msra.mxu0 0
  %320 = vmatprep.subr.bf16.mxu0 0
  %321 = vmatpush2.bf16.xpose.msra.mxu0 0
  %322 = vmatprep.subr.bf16.mxu0 0
  %323 = vmatpush2.bf16.xpose.msra.mxu0 0
  %324 = vmatprep.subr.bf16.mxu0 0
  %325 = vmatpush2.bf16.xpose.msra.mxu0 0
  %326 = vmatprep.mubr.bf16.mxu0 0
  %327 = vmatmul.mubr.bf16.gmra.mxu0 %v289
  %v328 = vpop.f32.mrf.mxu0
  %v329 = vadd.f32 0.0, %v328
  %v330 = vpop.f32.mrf.mxu0
  %v331 = vpop.f32.mrf.mxu0
  %v332 = vadd.f32 0.0, %v331
  %v333 = vpop.f32.mrf.mxu0
  %334 = vdwg.mxu0
  %336 = vrot.lane.b32.xlu0 %v281, 96
  %v337 = vpop.permute.xlu0 %336
  %v339 = vsel %vm287, %v281, 0
  %v342 = vsel %vm287, %v337, 0
  %344 = vmatprep.subr.bf16.mxu0 0
  %345 = vmatpush1.bf16.xpose.msra.mxu0 0
  %346 = vmatprep.subr.bf16.mxu0 0
  %347 = vmatpush1.bf16.xpose.msra.mxu0 0
  %348 = vmatprep.subr.bf16.mxu0 0
  %349 = vmatpush1.bf16.xpose.msra.mxu0 0
  %350 = vmatprep.subr.bf16.mxu0 0
  %351 = vmatpush1.bf16.xpose.msra.mxu0 0
  %352 = vmatprep.subr.bf16.mxu0 0
  %353 = vmatpush1.bf16.xpose.msra.mxu0 0
  %354 = vmatprep.subr.bf16.mxu0 0
  %355 = vmatpush1.bf16.xpose.msra.mxu0 0
  %356 = vmatprep.subr.bf16.mxu0 0
  %357 = vmatpush1.bf16.xpose.msra.mxu0 0
  %358 = vmatprep.subr.bf16.mxu0 0
  %359 = vmatpush1.bf16.xpose.msra.mxu0 %v342
  %360 = vmatprep.subr.bf16.mxu0 0
  %361 = vmatpush2.bf16.xpose.msra.mxu0 0
  %362 = vmatprep.subr.bf16.mxu0 0
  %363 = vmatpush2.bf16.xpose.msra.mxu0 0
  %364 = vmatprep.subr.bf16.mxu0 0
  %365 = vmatpush2.bf16.xpose.msra.mxu0 0
  %366 = vmatprep.subr.bf16.mxu0 0
  %367 = vmatpush2.bf16.xpose.msra.mxu0 0
  %368 = vmatprep.subr.bf16.mxu0 0
  %369 = vmatpush2.bf16.xpose.msra.mxu0 0
  %370 = vmatprep.subr.bf16.mxu0 0
  %371 = vmatpush2.bf16.xpose.msra.mxu0 0
  %372 = vmatprep.subr.bf16.mxu0 0
  %373 = vmatpush2.bf16.xpose.msra.mxu0 0
  %374 = vmatprep.subr.bf16.mxu0 0
  %375 = vmatpush2.bf16.xpose.msra.mxu0 0
  %376 = vmatprep.mubr.bf16.mxu0 0
  %377 = vmatmul.mubr.bf16.gmra.mxu0 %v339
  %v378 = vpop.f32.mrf.mxu0
  %v379 = vadd.f32 0.0, %v378
  %v380 = vpop.f32.mrf.mxu0
  %v381 = vpop.f32.mrf.mxu0
  %v382 = vadd.f32 0.0, %v381
  %v383 = vpop.f32.mrf.mxu0
  %384 = vdwg.mxu0
  %386 = vrot.lane.b32.xlu0 %v282, 96
  %v387 = vpop.permute.xlu0 %386
  %v389 = vsel %vm287, %v282, 0
  %v392 = vsel %vm287, %v387, 0
  %394 = vmatprep.subr.bf16.mxu0 0
  %395 = vmatpush1.bf16.xpose.msra.mxu0 0
  %396 = vmatprep.subr.bf16.mxu0 0
  %397 = vmatpush1.bf16.xpose.msra.mxu0 0
  %398 = vmatprep.subr.bf16.mxu0 0
  %399 = vmatpush1.bf16.xpose.msra.mxu0 0
  %400 = vmatprep.subr.bf16.mxu0 0
  %401 = vmatpush1.bf16.xpose.msra.mxu0 0
  %402 = vmatprep.subr.bf16.mxu0 0
  %403 = vmatpush1.bf16.xpose.msra.mxu0 0
  %404 = vmatprep.subr.bf16.mxu0 0
  %405 = vmatpush1.bf16.xpose.msra.mxu0 0
  %406 = vmatprep.subr.bf16.mxu0 0
  %407 = vmatpush1.bf16.xpose.msra.mxu0 0
  %408 = vmatprep.subr.bf16.mxu0 0
  %409 = vmatpush1.bf16.xpose.msra.mxu0 %v392
  %410 = vmatprep.subr.bf16.mxu0 0
  %411 = vmatpush2.bf16.xpose.msra.mxu0 0
  %412 = vmatprep.subr.bf16.mxu0 0
  %413 = vmatpush2.bf16.xpose.msra.mxu0 0
  %414 = vmatprep.subr.bf16.mxu0 0
  %415 = vmatpush2.bf16.xpose.msra.mxu0 0
  %416 = vmatprep.subr.bf16.mxu0 0
  %417 = vmatpush2.bf16.xpose.msra.mxu0 0
  %418 = vmatprep.subr.bf16.mxu0 0
  %419 = vmatpush2.bf16.xpose.msra.mxu0 0
  %420 = vmatprep.subr.bf16.mxu0 0
  %421 = vmatpush2.bf16.xpose.msra.mxu0 0
  %422 = vmatprep.subr.bf16.mxu0 0
  %423 = vmatpush2.bf16.xpose.msra.mxu0 0
  %424 = vmatprep.subr.bf16.mxu0 0
  %425 = vmatpush2.bf16.xpose.msra.mxu0 0
  %426 = vmatprep.mubr.bf16.mxu0 0
  %427 = vmatmul.mubr.bf16.gmra.mxu0 %v389
  %v428 = vpop.f32.mrf.mxu0
  %v429 = vadd.f32 0.0, %v428
  %v430 = vpop.f32.mrf.mxu0
  %v431 = vpop.f32.mrf.mxu0
  %v432 = vadd.f32 0.0, %v431
  %v433 = vpop.f32.mrf.mxu0
  %434 = vdwg.mxu0
  %436 = vrot.lane.b32.xlu0 %v283, 96
  %v437 = vpop.permute.xlu0 %436
  %v439 = vsel %vm287, %v283, 0
  %v442 = vsel %vm287, %v437, 0
  %444 = vmatprep.subr.bf16.mxu0 0
  %445 = vmatpush1.bf16.xpose.msra.mxu0 0
  %446 = vmatprep.subr.bf16.mxu0 0
  %447 = vmatpush1.bf16.xpose.msra.mxu0 0
  %448 = vmatprep.subr.bf16.mxu0 0
  %449 = vmatpush1.bf16.xpose.msra.mxu0 0
  %450 = vmatprep.subr.bf16.mxu0 0
  %451 = vmatpush1.bf16.xpose.msra.mxu0 0
  %452 = vmatprep.subr.bf16.mxu0 0
  %453 = vmatpush1.bf16.xpose.msra.mxu0 0
  %454 = vmatprep.subr.bf16.mxu0 0
  %455 = vmatpush1.bf16.xpose.msra.mxu0 0
  %456 = vmatprep.subr.bf16.mxu0 0
  %457 = vmatpush1.bf16.xpose.msra.mxu0 0
  %458 = vmatprep.subr.bf16.mxu0 0
  %459 = vmatpush1.bf16.xpose.msra.mxu0 %v442
  %460 = vmatprep.subr.bf16.mxu0 0
  %461 = vmatpush2.bf16.xpose.msra.mxu0 0
  %462 = vmatprep.subr.bf16.mxu0 0
  %463 = vmatpush2.bf16.xpose.msra.mxu0 0
  %464 = vmatprep.subr.bf16.mxu0 0
  %465 = vmatpush2.bf16.xpose.msra.mxu0 0
  %466 = vmatprep.subr.bf16.mxu0 0
  %467 = vmatpush2.bf16.xpose.msra.mxu0 0
  %468 = vmatprep.subr.bf16.mxu0 0
  %469 = vmatpush2.bf16.xpose.msra.mxu0 0
  %470 = vmatprep.subr.bf16.mxu0 0
  %471 = vmatpush2.bf16.xpose.msra.mxu0 0
  %472 = vmatprep.subr.bf16.mxu0 0
  %473 = vmatpush2.bf16.xpose.msra.mxu0 0
  %474 = vmatprep.subr.bf16.mxu0 0
  %475 = vmatpush2.bf16.xpose.msra.mxu0 0
  %476 = vmatprep.mubr.bf16.mxu0 0
  %477 = vmatmul.mubr.bf16.gmra.mxu0 %v439
  %v478 = vpop.f32.mrf.mxu0
  %v479 = vadd.f32 0.0, %v478
  %v480 = vpop.f32.mrf.mxu0
  %v481 = vpop.f32.mrf.mxu0
  %v482 = vadd.f32 0.0, %v481
  %v483 = vpop.f32.mrf.mxu0
  %484 = vdwg.mxu0
  %v485 = vmul.f32 %v329, 0.25
  %v486 = vmul.f32 %v332, 0.25
  %v487 = vmul.f32 %v379, 0.25
  %v488 = vmul.f32 %v382, 0.25
  %v489 = vmul.f32 %v429, 0.25
  %v490 = vmul.f32 %v432, 0.25
  %v491 = vmul.f32 %v479, 0.25
  %v492 = vmul.f32 %v482, 0.25
  %v493 = vsel %vm287, %v485, -inf
  %494 = vmax.xlane.f32.xlu0 %v493
  %v495 = vpop.xlane.xlu0 %494
  %v496 = vsel %vm287, %v486, -inf
  %497 = vmax.xlane.f32.xlu0 %v496
  %v498 = vpop.xlane.xlu0 %497
  %v499 = vsel %vm287, %v487, -inf
  %500 = vmax.xlane.f32.xlu0 %v499
  %v501 = vpop.xlane.xlu0 %500
  %v502 = vsel %vm287, %v488, -inf
  %503 = vmax.xlane.f32.xlu0 %v502
  %v504 = vpop.xlane.xlu0 %503
  %v505 = vsel %vm287, %v489, -inf
  %506 = vmax.xlane.f32.xlu0 %v505
  %v507 = vpop.xlane.xlu0 %506
  %v508 = vsel %vm287, %v490, -inf
  %509 = vmax.xlane.f32.xlu0 %v508
  %v510 = vpop.xlane.xlu0 %509
  %v511 = vsel %vm287, %v491, -inf
  %512 = vmax.xlane.f32.xlu0 %v511
  %v513 = vpop.xlane.xlu0 %512
  %v514 = vsel %vm287, %v492, -inf
  %515 = vmax.xlane.f32.xlu0 %v514
  %v516 = vpop.xlane.xlu0 %515
  %v517 = vsub.f32 %v485, %v495
  %v518 = vsub.f32 %v486, %v498
  %v519 = vsub.f32 %v487, %v501
  %v520 = vsub.f32 %v488, %v504
  %v521 = vsub.f32 %v489, %v507
  %v522 = vsub.f32 %v490, %v510
  %v523 = vsub.f32 %v491, %v513
  %v524 = vsub.f32 %v492, %v516
  %v525 = vmul.f32 %v517, 1.442695
  %v526 = vpow.pop %v525
  %v527 = vmul.f32 %v518, 1.442695
  %v528 = vpow.pop %v527
  %v529 = vmul.f32 %v519, 1.442695
  %v530 = vpow.pop %v529
  %v531 = vmul.f32 %v520, 1.442695
  %v532 = vpow.pop %v531
  %v533 = vmul.f32 %v521, 1.442695
  %v534 = vpow.pop %v533
  %v535 = vmul.f32 %v522, 1.442695
  %v536 = vpow.pop %v535
  %v537 = vmul.f32 %v523, 1.442695
  %v538 = vpow.pop %v537
  %v539 = vmul.f32 %v524, 1.442695
  %v540 = vpow.pop %v539
  %v541 = vsel %vm287, %v526, 0.0
  %542 = vadd.xlane.f32.xlu0 %v541
  %v543 = vpop.xlane.xlu0 %542
  %v544 = vsel %vm287, %v528, 0.0
  %545 = vadd.xlane.f32.xlu0 %v544
  %v546 = vpop.xlane.xlu0 %545
  %v547 = vsel %vm287, %v530, 0.0
  %548 = vadd.xlane.f32.xlu0 %v547
  %v549 = vpop.xlane.xlu0 %548
  %v550 = vsel %vm287, %v532, 0.0
  %551 = vadd.xlane.f32.xlu0 %v550
  %v552 = vpop.xlane.xlu0 %551
  %v553 = vsel %vm287, %v534, 0.0
  %554 = vadd.xlane.f32.xlu0 %v553
  %v555 = vpop.xlane.xlu0 %554
  %v556 = vsel %vm287, %v536, 0.0
  %557 = vadd.xlane.f32.xlu0 %v556
  %v558 = vpop.xlane.xlu0 %557
  %v559 = vsel %vm287, %v538, 0.0
  %560 = vadd.xlane.f32.xlu0 %v559
  %v561 = vpop.xlane.xlu0 %560
  %v562 = vsel %vm287, %v540, 0.0
  %563 = vadd.xlane.f32.xlu0 %v562
  %v564 = vpop.xlane.xlu0 %563
  %v565 = vrcp.pop %v543
  %v566 = vrcp.pop %v546
  %v567 = vrcp.pop %v549
  %v568 = vrcp.pop %v552
  %v569 = vrcp.pop %v555
  %v570 = vrcp.pop %v558
  %v571 = vrcp.pop %v561
  %v572 = vrcp.pop %v564
  %v573 = vmul.f32 %v526, %v565
  %v574 = vmul.f32 %v528, %v566
  %v575 = vmul.f32 %v530, %v567
  %v576 = vmul.f32 %v532, %v568
  %v577 = vmul.f32 %v534, %v569
  %v578 = vmul.f32 %v536, %v570
  %v579 = vmul.f32 %v538, %v571
  %v580 = vmul.f32 %v540, %v572
  %v581 = vpack.c.bf16 %v574, %v573
  %v582 = vpack.c.bf16 %v576, %v575
  %v583 = vpack.c.bf16 %v578, %v577
  %v584 = vpack.c.bf16 %v580, %v579
  %585 = vrot.lane.b32.xlu0 %v280, 64
  %v586 = vpop.permute.xlu0 %585
  %v589 = vsel %vm287, %v581, 0
  %591 = vmatprep.subr.bf16.mxu0 0
  %592 = vmatpush1.bf16.msra.mxu0 0
  %593 = vmatprep.subr.bf16.mxu0 0
  %594 = vmatpush1.bf16.msra.mxu0 0
  %595 = vmatprep.subr.bf16.mxu0 0
  %596 = vmatpush1.bf16.msra.mxu0 0
  %597 = vmatprep.subr.bf16.mxu0 0
  %598 = vmatpush1.bf16.msra.mxu0 0
  %599 = vmatprep.subr.bf16.mxu0 0
  %600 = vmatpush1.bf16.msra.mxu0 0
  %601 = vmatprep.subr.bf16.mxu0 0
  %602 = vmatpush1.bf16.msra.mxu0 0
  %603 = vmatprep.subr.bf16.mxu0 0
  %604 = vmatpush1.bf16.msra.mxu0 0
  %605 = vmatprep.subr.bf16.mxu0 0
  %606 = vmatpush1.bf16.msra.mxu0 %v586
  %607 = vmatprep.subr.bf16.mxu0 0
  %608 = vmatpush2.bf16.msra.mxu0 0
  %609 = vmatprep.subr.bf16.mxu0 0
  %610 = vmatpush2.bf16.msra.mxu0 0
  %611 = vmatprep.subr.bf16.mxu0 0
  %612 = vmatpush2.bf16.msra.mxu0 0
  %613 = vmatprep.subr.bf16.mxu0 0
  %614 = vmatpush2.bf16.msra.mxu0 0
  %615 = vmatprep.subr.bf16.mxu0 0
  %616 = vmatpush2.bf16.msra.mxu0 0
  %617 = vmatprep.subr.bf16.mxu0 0
  %618 = vmatpush2.bf16.msra.mxu0 0
  %619 = vmatprep.subr.bf16.mxu0 0
  %620 = vmatpush2.bf16.msra.mxu0 0
  %621 = vmatprep.subr.bf16.mxu0 0
  %622 = vmatpush2.bf16.msra.mxu0 0
  %623 = vmatprep.mubr.bf16.mxu0 0
  %624 = vmatmul.mubr.bf16.gmra.mxu0 %v589
  %v625 = vpop.f32.mrf.mxu0
  %v626 = vadd.f32 0.0, %v625
  %v627 = vpop.f32.mrf.mxu0
  %v628 = vpop.f32.mrf.mxu0
  %v629 = vadd.f32 0.0, %v628
  %v630 = vpop.f32.mrf.mxu0
  %631 = vdwg.mxu0
  %632 = vrot.lane.b32.xlu0 %v281, 64
  %v633 = vpop.permute.xlu0 %632
  %v636 = vsel %vm287, %v582, 0
  %638 = vmatprep.subr.bf16.mxu0 0
  %639 = vmatpush1.bf16.msra.mxu0 0
  %640 = vmatprep.subr.bf16.mxu0 0
  %641 = vmatpush1.bf16.msra.mxu0 0
  %642 = vmatprep.subr.bf16.mxu0 0
  %643 = vmatpush1.bf16.msra.mxu0 0
  %644 = vmatprep.subr.bf16.mxu0 0
  %645 = vmatpush1.bf16.msra.mxu0 0
  %646 = vmatprep.subr.bf16.mxu0 0
  %647 = vmatpush1.bf16.msra.mxu0 0
  %648 = vmatprep.subr.bf16.mxu0 0
  %649 = vmatpush1.bf16.msra.mxu0 0
  %650 = vmatprep.subr.bf16.mxu0 0
  %651 = vmatpush1.bf16.msra.mxu0 0
  %652 = vmatprep.subr.bf16.mxu0 0
  %653 = vmatpush1.bf16.msra.mxu0 %v633
  %654 = vmatprep.subr.bf16.mxu0 0
  %655 = vmatpush2.bf16.msra.mxu0 0
  %656 = vmatprep.subr.bf16.mxu0 0
  %657 = vmatpush2.bf16.msra.mxu0 0
  %658 = vmatprep.subr.bf16.mxu0 0
  %659 = vmatpush2.bf16.msra.mxu0 0
  %660 = vmatprep.subr.bf16.mxu0 0
  %661 = vmatpush2.bf16.msra.mxu0 0
  %662 = vmatprep.subr.bf16.mxu0 0
  %663 = vmatpush2.bf16.msra.mxu0 0
  %664 = vmatprep.subr.bf16.mxu0 0
  %665 = vmatpush2.bf16.msra.mxu0 0
  %666 = vmatprep.subr.bf16.mxu0 0
  %667 = vmatpush2.bf16.msra.mxu0 0
  %668 = vmatprep.subr.bf16.mxu0 0
  %669 = vmatpush2.bf16.msra.mxu0 0
  %670 = vmatprep.mubr.bf16.mxu0 0
  %671 = vmatmul.mubr.bf16.gmra.mxu0 %v636
  %v672 = vpop.f32.mrf.mxu0
  %v673 = vadd.f32 0.0, %v672
  %v674 = vpop.f32.mrf.mxu0
  %v675 = vpop.f32.mrf.mxu0
  %v676 = vadd.f32 0.0, %v675
  %v677 = vpop.f32.mrf.mxu0
  %678 = vdwg.mxu0
  %679 = vrot.lane.b32.xlu0 %v282, 64
  %v680 = vpop.permute.xlu0 %679
  %v683 = vsel %vm287, %v583, 0
  %685 = vmatprep.subr.bf16.mxu0 0
  %686 = vmatpush1.bf16.msra.mxu0 0
  %687 = vmatprep.subr.bf16.mxu0 0
  %688 = vmatpush1.bf16.msra.mxu0 0
  %689 = vmatprep.subr.bf16.mxu0 0
  %690 = vmatpush1.bf16.msra.mxu0 0
  %691 = vmatprep.subr.bf16.mxu0 0
  %692 = vmatpush1.bf16.msra.mxu0 0
  %693 = vmatprep.subr.bf16.mxu0 0
  %694 = vmatpush1.bf16.msra.mxu0 0
  %695 = vmatprep.subr.bf16.mxu0 0
  %696 = vmatpush1.bf16.msra.mxu0 0
  %697 = vmatprep.subr.bf16.mxu0 0
  %698 = vmatpush1.bf16.msra.mxu0 0
  %699 = vmatprep.subr.bf16.mxu0 0
  %700 = vmatpush1.bf16.msra.mxu0 %v680
  %701 = vmatprep.subr.bf16.mxu0 0
  %702 = vmatpush2.bf16.msra.mxu0 0
  %703 = vmatprep.subr.bf16.mxu0 0
  %704 = vmatpush2.bf16.msra.mxu0 0
  %705 = vmatprep.subr.bf16.mxu0 0
  %706 = vmatpush2.bf16.msra.mxu0 0
  %707 = vmatprep.subr.bf16.mxu0 0
  %708 = vmatpush2.bf16.msra.mxu0 0
  %709 = vmatprep.subr.bf16.mxu0 0
  %710 = vmatpush2.bf16.msra.mxu0 0
  %711 = vmatprep.subr.bf16.mxu0 0
  %712 = vmatpush2.bf16.msra.mxu0 0
  %713 = vmatprep.subr.bf16.mxu0 0
  %714 = vmatpush2.bf16.msra.mxu0 0
  %715 = vmatprep.subr.bf16.mxu0 0
  %716 = vmatpush2.bf16.msra.mxu0 0
  %717 = vmatprep.mubr.bf16.mxu0 0
  %718 = vmatmul.mubr.bf16.gmra.mxu0 %v683
  %v719 = vpop.f32.mrf.mxu0
  %v720 = vadd.f32 0.0, %v719
  %v721 = vpop.f32.mrf.mxu0
  %v722 = vpop.f32.mrf.mxu0
  %v723 = vadd.f32 0.0, %v722
  %v724 = vpop.f32.mrf.mxu0
  %725 = vdwg.mxu0
  %726 = vrot.lane.b32.xlu0 %v283, 64
  %v727 = vpop.permute.xlu0 %726
  %v730 = vsel %vm287, %v584, 0
  %732 = vmatprep.subr.bf16.mxu0 0
  %733 = vmatpush1.bf16.msra.mxu0 0
  %734 = vmatprep.subr.bf16.mxu0 0
  %735 = vmatpush1.bf16.msra.mxu0 0
  %736 = vmatprep.subr.bf16.mxu0 0
  %737 = vmatpush1.bf16.msra.mxu0 0
  %738 = vmatprep.subr.bf16.mxu0 0
  %739 = vmatpush1.bf16.msra.mxu0 0
  %740 = vmatprep.subr.bf16.mxu0 0
  %741 = vmatpush1.bf16.msra.mxu0 0
  %742 = vmatprep.subr.bf16.mxu0 0
  %743 = vmatpush1.bf16.msra.mxu0 0
  %744 = vmatprep.subr.bf16.mxu0 0
  %745 = vmatpush1.bf16.msra.mxu0 0
  %746 = vmatprep.subr.bf16.mxu0 0
  %747 = vmatpush1.bf16.msra.mxu0 %v727
  %748 = vmatprep.subr.bf16.mxu0 0
  %749 = vmatpush2.bf16.msra.mxu0 0
  %750 = vmatprep.subr.bf16.mxu0 0
  %751 = vmatpush2.bf16.msra.mxu0 0
  %752 = vmatprep.subr.bf16.mxu0 0
  %753 = vmatpush2.bf16.msra.mxu0 0
  %754 = vmatprep.subr.bf16.mxu0 0
  %755 = vmatpush2.bf16.msra.mxu0 0
  %756 = vmatprep.subr.bf16.mxu0 0
  %757 = vmatpush2.bf16.msra.mxu0 0
  %758 = vmatprep.subr.bf16.mxu0 0
  %759 = vmatpush2.bf16.msra.mxu0 0
  %760 = vmatprep.subr.bf16.mxu0 0
  %761 = vmatpush2.bf16.msra.mxu0 0
  %762 = vmatprep.subr.bf16.mxu0 0
  %763 = vmatpush2.bf16.msra.mxu0 0
  %764 = vmatprep.mubr.bf16.mxu0 0
  %765 = vmatmul.mubr.bf16.gmra.mxu0 %v730
  %v766 = vpop.f32.mrf.mxu0
  %v767 = vadd.f32 0.0, %v766
  %v768 = vpop.f32.mrf.mxu0
  %v769 = vpop.f32.mrf.mxu0
  %v770 = vadd.f32 0.0, %v769
  %v771 = vpop.f32.mrf.mxu0
  %772 = vdwg.mxu0
  %777 = vrot.lane.b32.xlu0 %v720, 16
  %v778 = vpop.permute.xlu0 %777
  %779 = vrot.lane.b32.xlu0 %v723, 16
  %v780 = vpop.permute.xlu0 %779
  %781 = vrot.lane.b32.xlu0 %v767, 16
  %v782 = vpop.permute.xlu0 %781
  %783 = vrot.lane.b32.xlu0 %v770, 16
  %v784 = vpop.permute.xlu0 %783
  %v789 = vsel %vm287, %v626, %v778
  %v790 = vsel %vm287, %v629, %v780
  %v791 = vsel %vm287, %v673, %v782
  %v792 = vsel %vm287, %v676, %v784
  %v793 = vpack.c.bf16 %v790, %v789
  %v794 = vpack.c.bf16 %v792, %v791
  %v795 = vld [vmem:[%s1 + $0x28] sm:$0xf]
  %v796 = vld [vmem:[%s1 + $0x2c] sm:$0xf]
  %v797 = vld [vmem:[%s1 + $0x30] sm:$0xf]
  %v798 = vld [vmem:[%s1 + $0x34] sm:$0xf]
  %v803 = vunpack.c.l.b16 %v795
  %v804 = vunpack.c.l.b16 %v796
  %v805 = vunpack.c.l.b16 %v797
  %v806 = vunpack.c.l.b16 %v798
  %v807 = vpack.c.b16 %v804, %v803
  %v808 = vpack.c.b16 %v806, %v805
  %v812 = vsel %vm116, %v793, 0
  %v815 = vsel %vm116, %v794, 0
  %817 = vmatprep.subr.bf16.mxu0 0
  %818 = vmatpush1.bf16.msra.mxu0 0
  %819 = vmatprep.subr.bf16.mxu0 0
  %820 = vmatpush1.bf16.msra.mxu0 0
  %821 = vmatprep.subr.bf16.mxu0 0
  %822 = vmatpush1.bf16.msra.mxu0 0
  %823 = vmatprep.subr.bf16.mxu0 0
  %824 = vmatpush1.bf16.msra.mxu0 0
  %825 = vmatprep.subr.bf16.mxu0 0
  %826 = vmatpush1.bf16.msra.mxu0 0
  %827 = vmatprep.subr.bf16.mxu0 0
  %828 = vmatpush1.bf16.msra.mxu0 0
  %829 = vmatprep.subr.bf16.mxu0 0
  %830 = vmatpush1.bf16.msra.mxu0 %v808
  %831 = vmatprep.subr.bf16.mxu0 0
  %832 = vmatpush1.bf16.msra.mxu0 %v807
  %833 = vmatprep.subr.bf16.mxu0 0
  %834 = vmatpush2.bf16.msra.mxu0 0
  %835 = vmatprep.subr.bf16.mxu0 0
  %836 = vmatpush2.bf16.msra.mxu0 0
  %837 = vmatprep.subr.bf16.mxu0 0
  %838 = vmatpush2.bf16.msra.mxu0 0
  %839 = vmatprep.subr.bf16.mxu0 0
  %840 = vmatpush2.bf16.msra.mxu0 0
  %841 = vmatprep.subr.bf16.mxu0 0
  %842 = vmatpush2.bf16.msra.mxu0 0
  %843 = vmatprep.subr.bf16.mxu0 0
  %844 = vmatpush2.bf16.msra.mxu0 0
  %845 = vmatprep.subr.bf16.mxu0 0
  %846 = vmatpush2.bf16.msra.mxu0 0
  %847 = vmatprep.subr.bf16.mxu0 0
  %848 = vmatpush2.bf16.msra.mxu0 0
  %849 = vmatprep.mubr.bf16.mxu0 0
  %850 = vmatmul.mubr.bf16.gmra.mxu0 %v812
  %v851 = vpop.f32.mrf.mxu0
  %v852 = vadd.f32 0.0, %v851
  %v853 = vpop.f32.mrf.mxu0
  %v854 = vpop.f32.mrf.mxu0
  %v855 = vadd.f32 0.0, %v854
  %v856 = vpop.f32.mrf.mxu0
  %857 = vmatprep.mubr.bf16.mxu0 0
  %858 = vmatmul.mubr.bf16.gmra.mxu0 %v815
  %v859 = vpop.f32.mrf.mxu0
  %v860 = vadd.f32 0.0, %v859
  %v861 = vpop.f32.mrf.mxu0
  %v862 = vpop.f32.mrf.mxu0
  %v863 = vadd.f32 0.0, %v862
  %v864 = vpop.f32.mrf.mxu0
  %865 = vdwg.mxu0
  %v866 = vadd.f32 %v100, %v852
  %v867 = vadd.f32 %v103, %v855
  %v868 = vadd.f32 %v108, %v860
  %v869 = vadd.f32 %v111, %v863
  %v870 = vld [vmem:[%s2 + $0x4] sm:$0x1]
  %v871 = vlaneseq
  %v872 = vshrl.u32 %v871, 7
  %v873 = vsub.s32 0, %v872
  %v874 = vrot.slane %v870, %v873
  %v875 = vadd.f32 %v866, %v874
  %v876 = vadd.f32 %v867, %v874
  %v877 = vadd.f32 %v868, %v874
  %v878 = vadd.f32 %v869, %v874
  %v879 = vld [vmem:[%s2 + $0x5] sm:$0x1]
  %v880 = vld [vmem:[%s2 + $0x6] sm:$0x1]
  %v881 = vsel %vm116, %v875, 0.0
  %882 = vadd.xlane.f32.xlu0 %v881
  %v883 = vpop.xlane.xlu0 %882
  %v884 = vsel %vm116, %v876, 0.0
  %885 = vadd.xlane.f32.xlu0 %v884
  %v886 = vpop.xlane.xlu0 %885
  %v887 = vsel %vm116, %v877, 0.0
  %888 = vadd.xlane.f32.xlu0 %v887
  %v889 = vpop.xlane.xlu0 %888
  %v890 = vsel %vm116, %v878, 0.0
  %891 = vadd.xlane.f32.xlu0 %v890
  %v892 = vpop.xlane.xlu0 %891
  %v893 = vmul.f32 %v883, %v129
  %v894 = vmul.f32 %v886, %v129
  %v895 = vmul.f32 %v889, %v129
  %v896 = vmul.f32 %v892, %v129
  %v897 = vsub.f32 %v875, %v893
  %v898 = vsub.f32 %v876, %v894
  %v899 = vsub.f32 %v877, %v895
  %v900 = vsub.f32 %v878, %v896
  %v901 = vmul.f32 %v897, %v897
  %v902 = vmul.f32 %v898, %v898
  %v903 = vmul.f32 %v899, %v899
  %v904 = vmul.f32 %v900, %v900
  %v905 = vsel %vm116, %v901, 0.0
  %906 = vadd.xlane.f32.xlu0 %v905
  %v907 = vpop.xlane.xlu0 %906
  %v908 = vsel %vm116, %v902, 0.0
  %909 = vadd.xlane.f32.xlu0 %v908
  %v910 = vpop.xlane.xlu0 %909
  %v911 = vsel %vm116, %v903, 0.0
  %912 = vadd.xlane.f32.xlu0 %v911
  %v913 = vpop.xlane.xlu0 %912
  %v914 = vsel %vm116, %v904, 0.0
  %915 = vadd.xlane.f32.xlu0 %v914
  %v916 = vpop.xlane.xlu0 %915
  %v917 = vmul.f32 %v907, %v129
  %v918 = vmul.f32 %v910, %v129
  %v919 = vmul.f32 %v913, %v129
  %v920 = vmul.f32 %v916, %v129
  %v921 = vadd.f32 %v917, 1e-05
  %v922 = vadd.f32 %v918, 1e-05
  %v923 = vadd.f32 %v919, 1e-05
  %v924 = vadd.f32 %v920, 1e-05
  %v925 = vrsqrt.pop %v921
  %v926 = vrsqrt.pop %v922
  %v927 = vrsqrt.pop %v923
  %v928 = vrsqrt.pop %v924
  %v929 = vmul.f32 %v897, %v925
  %v930 = vmul.f32 %v898, %v926
  %v931 = vmul.f32 %v899, %v927
  %v932 = vmul.f32 %v900, %v928
  %v933 = vlaneseq
  %v934 = vshrl.u32 %v933, 7
  %v935 = vsub.s32 0, %v934
  %v936 = vrot.slane %v879, %v935
  %v937 = vmul.f32 %v929, %v936
  %v938 = vmul.f32 %v930, %v936
  %v939 = vmul.f32 %v931, %v936
  %v940 = vmul.f32 %v932, %v936
  %v941 = vlaneseq
  %v942 = vshrl.u32 %v941, 7
  %v943 = vsub.s32 0, %v942
  %v944 = vrot.slane %v880, %v943
  %v945 = vadd.f32 %v937, %v944
  %v946 = vadd.f32 %v938, %v944
  %v947 = vadd.f32 %v939, %v944
  %v948 = vadd.f32 %v940, %v944
  %v949 = vpack.c.bf16 %v946, %v945
  %v950 = vpack.c.bf16 %v948, %v947
  %v951 = vld [vmem:[%s1 + $0x38] sm:$0xf]
  %v952 = vld [vmem:[%s1 + $0x3c] sm:$0xf]
  %v953 = vld [vmem:[%s1 + $0x40] sm:$0xf]
  %v954 = vld [vmem:[%s1 + $0x44] sm:$0xf]
  %v955 = vld [vmem:[%s2 + $0x7] sm:$0x1]
  %v956 = vlaneseq
  %v957 = vshrl.u32 %v956, 7
  %v958 = vsub.s32 0, %v957
  %v959 = vrot.slane %v955, %v958
  %v964 = vunpack.c.l.b16 %v951
  %v965 = vunpack.c.l.b16 %v952
  %v966 = vunpack.c.l.b16 %v953
  %v967 = vunpack.c.l.b16 %v954
  %v968 = vpack.c.b16 %v965, %v964
  %v969 = vpack.c.b16 %v967, %v966
  %v973 = vsel %vm116, %v949, 0
  %v976 = vsel %vm116, %v950, 0
  %978 = vmatprep.subr.bf16.mxu0 0
  %979 = vmatpush1.bf16.msra.mxu0 0
  %980 = vmatprep.subr.bf16.mxu0 0
  %981 = vmatpush1.bf16.msra.mxu0 0
  %982 = vmatprep.subr.bf16.mxu0 0
  %983 = vmatpush1.bf16.msra.mxu0 0
  %984 = vmatprep.subr.bf16.mxu0 0
  %985 = vmatpush1.bf16.msra.mxu0 0
  %986 = vmatprep.subr.bf16.mxu0 0
  %987 = vmatpush1.bf16.msra.mxu0 0
  %988 = vmatprep.subr.bf16.mxu0 0
  %989 = vmatpush1.bf16.msra.mxu0 0
  %990 = vmatprep.subr.bf16.mxu0 0
  %991 = vmatpush1.bf16.msra.mxu0 %v969
  %992 = vmatprep.subr.bf16.mxu0 0
  %993 = vmatpush1.bf16.msra.mxu0 %v968
  %994 = vmatprep.subr.bf16.mxu0 0
  %995 = vmatpush2.bf16.msra.mxu0 0
  %996 = vmatprep.subr.bf16.mxu0 0
  %997 = vmatpush2.bf16.msra.mxu0 0
  %998 = vmatprep.subr.bf16.mxu0 0
  %999 = vmatpush2.bf16.msra.mxu0 0
  %1000 = vmatprep.subr.bf16.mxu0 0
  %1001 = vmatpush2.bf16.msra.mxu0 0
  %1002 = vmatprep.subr.bf16.mxu0 0
  %1003 = vmatpush2.bf16.msra.mxu0 0
  %1004 = vmatprep.subr.bf16.mxu0 0
  %1005 = vmatpush2.bf16.msra.mxu0 0
  %1006 = vmatprep.subr.bf16.mxu0 0
  %1007 = vmatpush2.bf16.msra.mxu0 0
  %1008 = vmatprep.subr.bf16.mxu0 0
  %1009 = vmatpush2.bf16.msra.mxu0 0
  %1010 = vmatprep.mubr.bf16.mxu0 0
  %1011 = vmatmul.mubr.bf16.gmra.mxu0 %v973
  %v1012 = vpop.f32.mrf.mxu0
  %v1013 = vadd.f32 %v959, %v1012
  %v1014 = vpop.f32.mrf.mxu0
  %v1015 = vpop.f32.mrf.mxu0
  %v1016 = vadd.f32 %v959, %v1015
  %v1017 = vpop.f32.mrf.mxu0
  %1018 = vmatprep.mubr.bf16.mxu0 0
  %1019 = vmatmul.mubr.bf16.gmra.mxu0 %v976
  %v1020 = vpop.f32.mrf.mxu0
  %v1021 = vadd.f32 %v959, %v1020
  %v1022 = vpop.f32.mrf.mxu0
  %v1023 = vpop.f32.mrf.mxu0
  %v1024 = vadd.f32 %v959, %v1023
  %v1025 = vpop.f32.mrf.mxu0
  %1026 = vdwg.mxu0
  %v1027 = vmul.f32 %v1013, %v1013
  %v1028 = vmul.f32 %v1016, %v1016
  %v1029 = vmul.f32 %v1021, %v1021
  %v1030 = vmul.f32 %v1024, %v1024
  %v1031 = vmul.f32 %v1013, %v1027
  %v1032 = vmul.f32 %v1016, %v1028
  %v1033 = vmul.f32 %v1021, %v1029
  %v1034 = vmul.f32 %v1024, %v1030
  %v1035 = vmul.f32 %v1031, 0.044715
  %v1036 = vmul.f32 %v1032, 0.044715
  %v1037 = vmul.f32 %v1033, 0.044715
  %v1038 = vmul.f32 %v1034, 0.044715
  %v1039 = vadd.f32 %v1013, %v1035
  %v1040 = vadd.f32 %v1016, %v1036
  %v1041 = vadd.f32 %v1021, %v1037
  %v1042 = vadd.f32 %v1024, %v1038
  %v1043 = vmul.f32 %v1039, 0.7978846
  %v1044 = vmul.f32 %v1040, 0.7978846
  %v1045 = vmul.f32 %v1041, 0.7978846
  %v1046 = vmul.f32 %v1042, 0.7978846
  %v1047 = vtanh.pop %v1043
  %v1048 = vtanh.pop %v1044
  %v1049 = vtanh.pop %v1045
  %v1050 = vtanh.pop %v1046
  %v1051 = vadd.f32 %v1047, 1.0
  %v1052 = vadd.f32 %v1048, 1.0
  %v1053 = vadd.f32 %v1049, 1.0
  %v1054 = vadd.f32 %v1050, 1.0
  %v1055 = vmul.f32 %v1051, 0.5
  %v1056 = vmul.f32 %v1052, 0.5
  %v1057 = vmul.f32 %v1053, 0.5
  %v1058 = vmul.f32 %v1054, 0.5
  %v1059 = vmul.f32 %v1013, %v1055
  %v1060 = vmul.f32 %v1016, %v1056
  %v1061 = vmul.f32 %v1021, %v1057
  %v1062 = vmul.f32 %v1024, %v1058
  %v1063 = vpack.c.bf16 %v1060, %v1059
  %v1064 = vpack.c.bf16 %v1062, %v1061
  %v1065 = vld [vmem:[%s1 + $0x48] sm:$0xf]
  %v1066 = vld [vmem:[%s1 + $0x4c] sm:$0xf]
  %v1067 = vld [vmem:[%s1 + $0x50] sm:$0xf]
  %v1068 = vld [vmem:[%s1 + $0x54] sm:$0xf]
  %v1069 = vld [vmem:[%s1 + $0x58] sm:$0xf]
  %v1070 = vld [vmem:[%s1 + $0x5c] sm:$0xf]
  %v1071 = vld [vmem:[%s1 + $0x60] sm:$0xf]
  %v1072 = vld [vmem:[%s1 + $0x64] sm:$0xf]
  %v1073 = vld [vmem:[%s1 + $0x68] sm:$0xf]
  %v1074 = vld [vmem:[%s1 + $0x6c] sm:$0xf]
  %v1075 = vld [vmem:[%s1 + $0x70] sm:$0xf]
  %v1076 = vld [vmem:[%s1 + $0x74] sm:$0xf]
  %v1077 = vld [vmem:[%s1 + $0x78] sm:$0xf]
  %v1078 = vld [vmem:[%s1 + $0x7c] sm:$0xf]
  %v1079 = vld [vmem:[%s1 + $0x80] sm:$0xf]
  %v1080 = vld [vmem:[%s1 + $0x84] sm:$0xf]
  %v1081 = vld [vmem:[%s2 + $0x8] sm:$0x1]
  %v1082 = vlaneseq
  %v1083 = vshrl.u32 %v1082, 7
  %v1084 = vsub.s32 0, %v1083
  %v1085 = vrot.slane %v1081, %v1084
  %v1102 = vunpack.c.l.b16 %v1065
  %v1103 = vunpack.c.l.b16 %v1066
  %v1104 = vunpack.c.l.b16 %v1067
  %v1105 = vunpack.c.l.b16 %v1068
  %v1106 = vunpack.c.l.b16 %v1069
  %v1107 = vunpack.c.l.b16 %v1070
  %v1108 = vunpack.c.l.b16 %v1071
  %v1109 = vunpack.c.l.b16 %v1072
  %v1110 = vunpack.c.l.b16 %v1073
  %v1111 = vunpack.c.l.b16 %v1074
  %v1112 = vunpack.c.l.b16 %v1075
  %v1113 = vunpack.c.l.b16 %v1076
  %v1114 = vunpack.c.l.b16 %v1077
  %v1115 = vunpack.c.l.b16 %v1078
  %v1116 = vunpack.c.l.b16 %v1079
  %v1117 = vunpack.c.l.b16 %v1080
  %v1118 = vpack.c.b16 %v1103, %v1102
  %v1119 = vpack.c.b16 %v1105, %v1104
  %v1120 = vpack.c.b16 %v1107, %v1106
  %v1121 = vpack.c.b16 %v1109, %v1108
  %v1122 = vpack.c.b16 %v1111, %v1110
  %v1123 = vpack.c.b16 %v1113, %v1112
  %v1124 = vpack.c.b16 %v1115, %v1114
  %v1125 = vpack.c.b16 %v1117, %v1116
  %1134 = vmatprep.subr.bf16.mxu0 0
  %1135 = vmatpush1.bf16.msra.mxu0 %v1125
  %1136 = vmatprep.subr.bf16.mxu0 0
  %1137 = vmatpush1.bf16.msra.mxu0 %v1124
  %1138 = vmatprep.subr.bf16.mxu0 0
  %1139 = vmatpush1.bf16.msra.mxu0 %v1123
  %1140 = vmatprep.subr.bf16.mxu0 0
  %1141 = vmatpush1.bf16.msra.mxu0 %v1122
  %1142 = vmatprep.subr.bf16.mxu0 0
  %1143 = vmatpush1.bf16.msra.mxu0 %v1121
  %1144 = vmatprep.subr.bf16.mxu0 0
  %1145 = vmatpush1.bf16.msra.mxu0 %v1120
  %1146 = vmatprep.subr.bf16.mxu0 0
  %1147 = vmatpush1.bf16.msra.mxu0 %v1119
  %1148 = vmatprep.subr.bf16.mxu0 0
  %1149 = vmatpush1.bf16.msra.mxu0 %v1118
  %1150 = vmatprep.subr.bf16.mxu0 0
  %1151 = vmatpush2.bf16.msra.mxu0 0
  %1152 = vmatprep.subr.bf16.mxu0 0
  %1153 = vmatpush2.bf16.msra.mxu0 0
  %1154 = vmatprep.subr.bf16.mxu0 0
  %1155 = vmatpush2.bf16.msra.mxu0 0
  %1156 = vmatprep.subr.bf16.mxu0 0
  %1157 = vmatpush2.bf16.msra.mxu0 0
  %1158 = vmatprep.subr.bf16.mxu0 0
  %1159 = vmatpush2.bf16.msra.mxu0 0
  %1160 = vmatprep.subr.bf16.mxu0 0
  %1161 = vmatpush2.bf16.msra.mxu0 0
  %1162 = vmatprep.subr.bf16.mxu0 0
  %1163 = vmatpush2.bf16.msra.mxu0 0
  %1164 = vmatprep.subr.bf16.mxu0 0
  %1165 = vmatpush2.bf16.msra.mxu0 0
  %1166 = vmatprep.mubr.bf16.mxu0 0
  %1167 = vmatmul.mubr.bf16.gmra.mxu0 %v1063
  %v1168 = vpop.f32.mrf.mxu0
  %v1169 = vadd.f32 %v1085, %v1168
  %v1170 = vpop.f32.mrf.mxu0
  %v1171 = vpop.f32.mrf.mxu0
  %v1172 = vadd.f32 %v1085, %v1171
  %v1173 = vpop.f32.mrf.mxu0
  %1174 = vmatprep.mubr.bf16.mxu0 0
  %1175 = vmatmul.mubr.bf16.gmra.mxu0 %v1064
  %v1176 = vpop.f32.mrf.mxu0
  %v1177 = vadd.f32 %v1085, %v1176
  %v1178 = vpop.f32.mrf.mxu0
  %v1179 = vpop.f32.mrf.mxu0
  %v1180 = vadd.f32 %v1085, %v1179
  %v1181 = vpop.f32.mrf.mxu0
  %1182 = vdwg.mxu0
  %v1183 = vadd.f32 %v875, %v1169
  %v1184 = vadd.f32 %v876, %v1172
  %v1185 = vadd.f32 %v877, %v1177
  %v1186 = vadd.f32 %v878, %v1180
  %v1187 = vld [vmem:[%s2 + $0x9] sm:$0x1]
  %v1188 = vld [vmem:[%s2 + $0xa] sm:$0x1]
  %v1189 = vsel %vm116, %v1183, 0.0
  %1190 = vadd.xlane.f32.xlu0 %v1189
  %v1191 = vpop.xlane.xlu0 %1190
  %v1192 = vsel %vm116, %v1184, 0.0
  %1193 = vadd.xlane.f32.xlu0 %v1192
  %v1194 = vpop.xlane.xlu0 %1193
  %v1195 = vsel %vm116, %v1185, 0.0
  %1196 = vadd.xlane.f32.xlu0 %v1195
  %v1197 = vpop.xlane.xlu0 %1196
  %v1198 = vsel %vm116, %v1186, 0.0
  %1199 = vadd.xlane.f32.xlu0 %v1198
  %v1200 = vpop.xlane.xlu0 %1199
  %v1201 = vmul.f32 %v1191, %v129
  %v1202 = vmul.f32 %v1194, %v129
  %v1203 = vmul.f32 %v1197, %v129
  %v1204 = vmul.f32 %v1200, %v129
  %v1205 = vsub.f32 %v1183, %v1201
  %v1206 = vsub.f32 %v1184, %v1202
  %v1207 = vsub.f32 %v1185, %v1203
  %v1208 = vsub.f32 %v1186, %v1204
  %v1209 = vmul.f32 %v1205, %v1205
  %v1210 = vmul.f32 %v1206, %v1206
  %v1211 = vmul.f32 %v1207, %v1207
  %v1212 = vmul.f32 %v1208, %v1208
  %v1213 = vsel %vm116, %v1209, 0.0
  %1214 = vadd.xlane.f32.xlu0 %v1213
  %v1215 = vpop.xlane.xlu0 %1214
  %v1216 = vsel %vm116, %v1210, 0.0
  %1217 = vadd.xlane.f32.xlu0 %v1216
  %v1218 = vpop.xlane.xlu0 %1217
  %v1219 = vsel %vm116, %v1211, 0.0
  %1220 = vadd.xlane.f32.xlu0 %v1219
  %v1221 = vpop.xlane.xlu0 %1220
  %v1222 = vsel %vm116, %v1212, 0.0
  %1223 = vadd.xlane.f32.xlu0 %v1222
  %v1224 = vpop.xlane.xlu0 %1223
  %v1225 = vmul.f32 %v1215, %v129
  %v1226 = vmul.f32 %v1218, %v129
  %v1227 = vmul.f32 %v1221, %v129
  %v1228 = vmul.f32 %v1224, %v129
  %v1229 = vadd.f32 %v1225, 1e-05
  %v1230 = vadd.f32 %v1226, 1e-05
  %v1231 = vadd.f32 %v1227, 1e-05
  %v1232 = vadd.f32 %v1228, 1e-05
  %v1233 = vrsqrt.pop %v1229
  %v1234 = vrsqrt.pop %v1230
  %v1235 = vrsqrt.pop %v1231
  %v1236 = vrsqrt.pop %v1232
  %v1237 = vmul.f32 %v1205, %v1233
  %v1238 = vmul.f32 %v1206, %v1234
  %v1239 = vmul.f32 %v1207, %v1235
  %v1240 = vmul.f32 %v1208, %v1236
  %v1241 = vlaneseq
  %v1242 = vshrl.u32 %v1241, 7
  %v1243 = vsub.s32 0, %v1242
  %v1244 = vrot.slane %v1187, %v1243
  %v1245 = vmul.f32 %v1237, %v1244
  %v1246 = vmul.f32 %v1238, %v1244
  %v1247 = vmul.f32 %v1239, %v1244
  %v1248 = vmul.f32 %v1240, %v1244
  %v1249 = vlaneseq
  %v1250 = vshrl.u32 %v1249, 7
  %v1251 = vsub.s32 0, %v1250
  %v1252 = vrot.slane %v1188, %v1251
  %v1253 = vadd.f32 %v1245, %v1252
  %v1254 = vadd.f32 %v1246, %v1252
  %v1255 = vadd.f32 %v1247, %v1252
  %v1256 = vadd.f32 %v1248, %v1252
  %v1257 = vsel %vm116, %v1253, 0.0
  %v1258 = vsel %vm116, %v1254, 0.0
  %v1259 = vsel %vm116, %v1255, 0.0
  %v1260 = vsel %vm116, %v1256, 0.0
  %1261 = vst [vmem:[%s3] sm:$0xff] %v1257
  %1262 = vst [vmem:[%s3 + $0x8] sm:$0xff] %v1258
  %1263 = vst [vmem:[%s3 + $0x10] sm:$0xff] %v1259
  %1264 = vst [vmem:[%s3 + $0x18] sm:$0xff] %v1260
  // Predicated region
  $region14: #{tallswin_forward.1} parent=0 // pred_check
    _
  $region15: #{tallswin_forward.1} parent=0 // pred_check_branch
    %1266 = sbr.rel (0) target = $region17
  $region16: #{tallswin_forward.1} parent=0 // pred_region
    _
  $region17: #{tallswin_forward.1} parent=0 // pred_fallthru
    _
  // Predicated region
  $region18: #{tallswin_forward.1} parent=0 // pred_check
    _
  $region19: #{tallswin_forward.1} parent=0 // pred_check_branch
    %1268 = sbr.rel (0) target = $region21
  $region20: #{tallswin_forward.1} parent=0 // pred_region
    _
  $region21: #{tallswin_forward.1} parent=0 // pred_fallthru
    _

</llo_original>
